<compile_context>
chip_gen: v7x
topology: tpu7x:2x2x1
jax: 0.10.0
libtpu: 0.0.40
codegen_flags: <defaults>
</compile_context>

<pallas_src>
import math
import functools

import jax
import jax.numpy as jnp
from jax.experimental import pallas as pl
from jax.experimental.pallas import tpu as pltpu


def _mha_kernel(q_ref, k_ref, v_ref, bias_ref,
                wq_ref, bq_ref, wk_ref, bk_ref, wv_ref, bv_ref,
                wo_ref, bo_ref,
                o_ref, *scratch,
                scale, compute_dtype, approx_recip):
    h = pl.program_id(2)

    # f32 outputs accumulate straight into the resident output block; other
    # output dtypes accumulate into an f32 VMEM scratch and cast at the end.
    acc_ref = scratch[0] if scratch else o_ref

    # Initialize the (1, tq, D) accumulator with the output-projection bias.
    @pl.when(h == 0)
    def _():
        acc_ref[...] = jnp.broadcast_to(bo_ref[...], acc_ref.shape).astype(acc_ref.dtype)

    xq = q_ref[0]                       # (tq, D)  compute_dtype
    xk = k_ref[0]                       # (S,  D)
    xv = v_ref[0]                       # (S,  D)

    # Resident full weight arrays; pick this head's block (no HBM re-fetch).
    wq = wq_ref[h]                      # (D, d_k) compute_dtype
    wk = wk_ref[h]
    wv = wv_ref[h]
    wo = wo_ref[h]                      # (d_k, D)
    bq = bq_ref[h]                      # (1, d_k) f32
    bk = bk_ref[h]
    bv = bv_ref[h]

    # Per-head projections (f32 MXU accumulation); fold 1/sqrt(d_k) into Q.
    qp = (jnp.dot(xq, wq, preferred_element_type=jnp.float32) + bq) * scale   # (tq, d_k)
    kp = jnp.dot(xk, wk, preferred_element_type=jnp.float32) + bk             # (S,  d_k)
    vp = jnp.dot(xv, wv, preferred_element_type=jnp.float32) + bv             # (S,  d_k)

    # scores = qp @ kp^T, contracting last dims of both operands (no transpose).
    scores = jax.lax.dot_general(
        qp.astype(compute_dtype), kp.astype(compute_dtype),
        dimension_numbers=(((1,), (1,)), ((), ())),
        preferred_element_type=jnp.float32)                                   # (tq, S) f32

    # Additive mask bias (0 / -10000), precomputed in the wrapper: one VPU add.
    scores = scores + bias_ref[0]

    # Numerically-stable softmax with DEFERRED normalization.
    m = jnp.max(scores, axis=-1, keepdims=True)
    p = jnp.exp(scores - m)                                                   # (tq, S)
    l = jnp.sum(p, axis=-1, keepdims=True)                                    # (tq, 1)

    attn = jnp.dot(p.astype(compute_dtype), vp.astype(compute_dtype),
                   preferred_element_type=jnp.float32)                        # (tq, d_k)
    attn = attn * pl.reciprocal(l, approx=approx_recip)                       # normalize late

    # This head's slice of the output projection, accumulated in f32.
    contrib = jnp.dot(attn.astype(compute_dtype), wo,
                      preferred_element_type=jnp.float32)                     # (tq, D)
    acc_ref[...] += contrib[None].astype(acc_ref.dtype)

    if scratch:   # only needed when the output dtype is narrower than f32
        @pl.when(h == pl.num_programs(2) - 1)
        def _():
            o_ref[...] = acc_ref[...].astype(o_ref.dtype)


def prepare_params(params, num_heads):
    """One-time repack (keep this OUTSIDE the per-step call path).

    nn.Linear weights (out, in) are transposed to (in, out) and split into
    per-head column blocks so the kernel never slices the lane dimension:
      wq_h/wk_h/wv_h : (H, D, d_k)   (columns of W.T, grouped per head)
      wo_h           : (H, d_k, D)   (rows of W_o.T, grouped per head)
      b{q,k,v}_h     : (H, 1, d_k),  bo: (1, D)
    """
    D = params["wq"].shape[0]
    d_k = D // num_heads

    def split_in_out(w):                    # (out, in) -> (H, in, d_k)
        return jnp.transpose(w.T.reshape(D, num_heads, d_k), (1, 0, 2))

    def split_bias(b):                      # (D,) -> (H, 1, d_k)
        return b.reshape(num_heads, 1, d_k)

    return {
        "wq_h": split_in_out(params["wq"]), "bq_h": split_bias(params["bq"]),
        "wk_h": split_in_out(params["wk"]), "bk_h": split_bias(params["bk"]),
        "wv_h": split_in_out(params["wv"]), "bv_h": split_bias(params["bv"]),
        "wo_h": params["wo"].T.reshape(num_heads, d_k, D),
        "bo":   params["bo"].reshape(1, D),
    }


def multi_head_attention(q, k, v, mask, prep, *, num_heads,
                         compute_dtype=jnp.float32, q_block=None,
                         approx_reciprocal=True,
                         vmem_limit_bytes=64 * 1024 * 1024):
    """q, k, v: (B, S, D); mask: (B, S, S) with 0 == masked.

    compute_dtype controls the MXU input dtype (use jnp.bfloat16 on v6e/v7x;
    benchmark vs f32 on v5e); accumulation, masking and softmax stay in f32.
    """
    B, S, D = q.shape
    H = num_heads
    d_k = D // H
    cd = compute_dtype

    # Q-tile size: bounds per-step VMEM (v7x) and adds a second parallel axis.
    if q_block is None:
        if S <= 512:
            q_block = S
        elif S % 512 == 0:
            q_block = 512
        elif S % 256 == 0:
            q_block = 256
        else:
            q_block = S
    assert S % q_block == 0, "q_block must divide the sequence length"
    tq = q_block

    qc, kc, vc = q.astype(cd), k.astype(cd), v.astype(cd)
    wq, wk = prep["wq_h"].astype(cd), prep["wk_h"].astype(cd)
    wv, wo = prep["wv_h"].astype(cd), prep["wo_h"].astype(cd)
    bq, bk, bv, bo = prep["bq_h"], prep["bk_h"], prep["bv_h"], prep["bo"]

    # Precomputed additive mask bias (0 / -10000); compute dtype halves bytes
    # on the bf16 path, while the in-kernel softmax math stays f32.
    mask_bias = jnp.where(mask == 0, jnp.float32(-10000.0), jnp.float32(0.0)).astype(cd)

    out_dtype = q.dtype
    use_scratch = jnp.dtype(out_dtype) != jnp.dtype(jnp.float32)

    kernel = functools.partial(_mha_kernel, scale=1.0 / math.sqrt(d_k),
                               compute_dtype=cd, approx_recip=approx_reciprocal)

    # Activations: batch/q-tile dependent, head-invariant.
    q_spec  = pl.BlockSpec((1, tq, D), lambda b, i, h: (b, i, 0))
    kv_spec = pl.BlockSpec((1, S, D),  lambda b, i, h: (b, 0, 0))
    m_spec  = pl.BlockSpec((1, tq, S), lambda b, i, h: (b, i, 0))
    # Weights / biases: grid-resident (constant index_map -> DMA'd once).
    w_spec  = pl.BlockSpec((H, D, d_k), lambda b, i, h: (0, 0, 0))
    bh_spec = pl.BlockSpec((H, 1, d_k), lambda b, i, h: (0, 0, 0))
    wo_spec = pl.BlockSpec((H, d_k, D), lambda b, i, h: (0, 0, 0))
    bo_spec = pl.BlockSpec((1, D),      lambda b, i, h: (0, 0))
    # Output: head-invariant block index -> resident f32 accumulator across h.
    o_spec  = pl.BlockSpec((1, tq, D), lambda b, i, h: (b, i, 0))

    c_bytes = jnp.dtype(cd).itemsize
    io_bytes = jnp.dtype(out_dtype).itemsize
    flops = B * (8 * S * D * D + 4 * S * S * D)
    bytes_accessed = ((3 * B * S * D + B * S * S) * c_bytes      # q/k/v + mask bias reads
                      + 4 * D * D * c_bytes + 4 * D * 4          # resident weights + biases
                      + B * S * D * io_bytes)                    # output write
    cost = pl.CostEstimate(flops=flops,
                           transcendentals=B * H * S * S,
                           bytes_accessed=bytes_accessed)

    scratch_shapes = [pltpu.VMEM((1, tq, D), jnp.float32)] if use_scratch else []

    return pl.pallas_call(
        kernel,
        out_shape=jax.ShapeDtypeStruct((B, S, D), out_dtype),
        grid_spec=pltpu.PrefetchScalarGridSpec(
            num_scalar_prefetch=0,
            grid=(B, S // tq, H),               # heads = reduction axis, last
            in_specs=[q_spec, kv_spec, kv_spec, m_spec,
                      w_spec, bh_spec, w_spec, bh_spec,
                      w_spec, bh_spec, wo_spec, bo_spec],
            out_specs=o_spec,
            scratch_shapes=scratch_shapes),
        compiler_params=pltpu.CompilerParams(
            dimension_semantics=("parallel", "parallel", "arbitrary"),
            vmem_limit_bytes=vmem_limit_bytes),
        cost_estimate=cost,
    )(qc, kc, vc, mask_bias, wq, bq, wk, bk, wv, bv, wo, bo)


def _reference(q, k, v, mask, params, *, num_heads):
    """Pure-JAX reference mirroring the PyTorch module."""
    B, S, D = q.shape
    d_k = D // num_heads

    def linear(x, w, b):
        return x @ w.T + b

    def split_heads(x):
        return x.reshape(B, S, num_heads, d_k).transpose(0, 2, 1, 3)

    Qp = split_heads(linear(q, params["wq"], params["bq"]))
    Kp = split_heads(linear(k, params["wk"], params["bk"]))
    Vp = split_heads(linear(v, params["wv"], params["bv"]))

    scores = jnp.einsum("bhqd,bhkd->bhqk", Qp, Kp) / math.sqrt(d_k)
    scores = jnp.where(mask[:, None, :, :] == 0, -10000.0, scores)
    p = jax.nn.softmax(scores, axis=-1)
    attn = jnp.einsum("bhqk,bhkd->bhqd", p, Vp)
    concat = attn.transpose(0, 2, 1, 3).reshape(B, S, D)
    return linear(concat, params["wo"], params["bo"])


if __name__ == "__main__":
    batch, seq, d_model, num_heads = 2, 16, 32, 4

    key = jax.random.PRNGKey(0)
    keys = jax.random.split(key, 12)

    # Deterministic nn.Linear-like init: uniform(-1/sqrt(in), 1/sqrt(in)).
    bound = 1.0 / math.sqrt(d_model)
    params = {
        "wq": jax.random.uniform(keys[0], (d_model, d_model), jnp.float32, -bound, bound),
        "bq": jax.random.uniform(keys[1], (d_model,), jnp.float32, -bound, bound),
        "wk": jax.random.uniform(keys[2], (d_model, d_model), jnp.float32, -bound, bound),
        "bk": jax.random.uniform(keys[3], (d_model,), jnp.float32, -bound, bound),
        "wv": jax.random.uniform(keys[4], (d_model, d_model), jnp.float32, -bound, bound),
        "bv": jax.random.uniform(keys[5], (d_model,), jnp.float32, -bound, bound),
        "wo": jax.random.uniform(keys[6], (d_model, d_model), jnp.float32, -bound, bound),
        "bo": jax.random.uniform(keys[7], (d_model,), jnp.float32, -bound, bound),
    }

    q = jax.random.normal(keys[8], (batch, seq, d_model), jnp.float32)
    k = jax.random.normal(keys[9], (batch, seq, d_model), jnp.float32)
    v = jax.random.normal(keys[10], (batch, seq, d_model), jnp.float32)

    # Causal mask (0 = masked), shared across heads.
    causal = jnp.tril(jnp.ones((seq, seq), jnp.float32))
    mask = jnp.broadcast_to(causal, (batch, seq, seq))

    # One-time parameter repack (outside the per-call path).
    prep = prepare_params(params, num_heads)

    ref = _reference(q, k, v, mask, params, num_heads=num_heads)

    # f32 path, single q-tile (tolerance covers the approx EUP reciprocal).
    out = multi_head_attention(q, k, v, mask, prep, num_heads=num_heads)
    out = jax.block_until_ready(out)
    assert out.shape == (batch, seq, d_model)
    assert jnp.allclose(out, ref, atol=1e-2, rtol=1e-2), "f32 kernel mismatch vs reference"

    # f32 path with Q-tiling exercised (two q-tiles, second parallel grid axis).
    out_tiled = multi_head_attention(q, k, v, mask, prep, num_heads=num_heads, q_block=8)
    out_tiled = jax.block_until_ready(out_tiled)
    assert jnp.allclose(out_tiled, ref, atol=1e-2, rtol=1e-2), "q-tiled kernel mismatch"

    # bf16 MXU-input path (v6e/v7x-preferred); accumulation/softmax stay f32.
    out_bf16 = multi_head_attention(q, k, v, mask, prep, num_heads=num_heads,
                                    compute_dtype=jnp.bfloat16)
    out_bf16 = jax.block_until_ready(out_bf16)
    assert jnp.allclose(out_bf16, ref, atol=7e-2, rtol=7e-2), "bf16 kernel mismatch vs reference"

    print("KERNEL_OK")
</pallas_src>

<mosaic_0001>
module attributes {stable_mosaic.version = 11 : i64} {
  func.func @_mha_kernel(%arg0: i32, %arg1: i32, %arg2: i32, %arg3: memref<1x16x32xf32, #tpu.memory_space<vmem>>, %arg4: memref<1x16x32xf32, #tpu.memory_space<vmem>>, %arg5: memref<1x16x32xf32, #tpu.memory_space<vmem>>, %arg6: memref<1x16x16xf32, #tpu.memory_space<vmem>>, %arg7: memref<4x32x8xf32, #tpu.memory_space<vmem>>, %arg8: memref<4x1x8xf32, #tpu.memory_space<vmem>>, %arg9: memref<4x32x8xf32, #tpu.memory_space<vmem>>, %arg10: memref<4x1x8xf32, #tpu.memory_space<vmem>>, %arg11: memref<4x32x8xf32, #tpu.memory_space<vmem>>, %arg12: memref<4x1x8xf32, #tpu.memory_space<vmem>>, %arg13: memref<4x8x32xf32, #tpu.memory_space<vmem>>, %arg14: memref<1x32xf32, #tpu.memory_space<vmem>>, %arg15: memref<1x16x32xf32, #tpu.memory_space<vmem>>) attributes {dimension_semantics = [#tpu.dimension_semantics<parallel>, #tpu.dimension_semantics<parallel>, #tpu.dimension_semantics<arbitrary>], iteration_bounds = array<i64: 2, 1, 4>, scalar_prefetch = 0 : i64, scratch_operands = 0 : i64, tpu.core_type = #tpu.core_type<tc>, window_params = [{transform_indices = @transform_0, window_bounds = array<i64: 1, 16, 32>}, {transform_indices = @transform_1, window_bounds = array<i64: 1, 16, 32>}, {transform_indices = @transform_2, window_bounds = array<i64: 1, 16, 32>}, {transform_indices = @transform_3, window_bounds = array<i64: 1, 16, 16>}, {pipeline_mode = #tpu.pipeline_mode<synchronous>, transform_indices = @transform_4, window_bounds = array<i64: 4, 32, 8>}, {pipeline_mode = #tpu.pipeline_mode<synchronous>, transform_indices = @transform_5, window_bounds = array<i64: 4, 1, 8>}, {pipeline_mode = #tpu.pipeline_mode<synchronous>, transform_indices = @transform_6, window_bounds = array<i64: 4, 32, 8>}, {pipeline_mode = #tpu.pipeline_mode<synchronous>, transform_indices = @transform_7, window_bounds = array<i64: 4, 1, 8>}, {pipeline_mode = #tpu.pipeline_mode<synchronous>, transform_indices = @transform_8, window_bounds = array<i64: 4, 32, 8>}, {pipeline_mode = #tpu.pipeline_mode<synchronous>, transform_indices = @transform_9, window_bounds = array<i64: 4, 1, 8>}, {pipeline_mode = #tpu.pipeline_mode<synchronous>, transform_indices = @transform_10, window_bounds = array<i64: 4, 8, 32>}, {pipeline_mode = #tpu.pipeline_mode<synchronous>, transform_indices = @transform_11, window_bounds = array<i64: 1, 32>}, {transform_indices = @transform_12, window_bounds = array<i64: 1, 16, 32>}]} {
    %c0_i32 = arith.constant 0 : i32
    %0 = arith.cmpi eq, %arg2, %c0_i32 : i32
    %1 = arith.extui %0 : i1 to i32
    %c0_i32_0 = arith.constant 0 : i32
    %2 = arith.cmpi ne, %1, %c0_i32_0 : i32
    scf.if %2 {
      %c0_40 = arith.constant 0 : index
      %c0_41 = arith.constant 0 : index
      %61 = vector.load %arg14[%c0_40, %c0_41] : memref<1x32xf32, #tpu.memory_space<vmem>>, vector<1x32xf32>
      %62 = vector.shape_cast %61 : vector<1x32xf32> to vector<1x1x32xf32>
      %63 = vector.broadcast %62 : vector<1x1x32xf32> to vector<1x16x32xf32>
      %c0_42 = arith.constant 0 : index
      %c0_43 = arith.constant 0 : index
      %c0_44 = arith.constant 0 : index
      %64 = vector.load %arg15[%c0_42, %c0_43, %c0_44] : memref<1x16x32xf32, #tpu.memory_space<vmem>>, vector<1x16x32xf32>
      tpu.vector_store %arg15[%c0_42, %c0_43, %c0_44], %63 {strides = array<i32>} : memref<1x16x32xf32, #tpu.memory_space<vmem>>, vector<1x16x32xf32>,
    } else {
    }
    %c0 = arith.constant 0 : index
    %c0_1 = arith.constant 0 : index
    %c0_2 = arith.constant 0 : index
    %3 = vector.load %arg3[%c0, %c0_1, %c0_2] : memref<1x16x32xf32, #tpu.memory_space<vmem>>, vector<1x16x32xf32>
    %4 = vector.shape_cast %3 : vector<1x16x32xf32> to vector<16x32xf32>
    %c0_3 = arith.constant 0 : index
    %c0_4 = arith.constant 0 : index
    %c0_5 = arith.constant 0 : index
    %5 = vector.load %arg4[%c0_3, %c0_4, %c0_5] : memref<1x16x32xf32, #tpu.memory_space<vmem>>, vector<1x16x32xf32>
    %6 = vector.shape_cast %5 : vector<1x16x32xf32> to vector<16x32xf32>
    %c0_6 = arith.constant 0 : index
    %c0_7 = arith.constant 0 : index
    %c0_8 = arith.constant 0 : index
    %7 = vector.load %arg5[%c0_6, %c0_7, %c0_8] : memref<1x16x32xf32, #tpu.memory_space<vmem>>, vector<1x16x32xf32>
    %8 = vector.shape_cast %7 : vector<1x16x32xf32> to vector<16x32xf32>
    %9 = arith.index_cast %arg2 : i32 to index
    %c0_9 = arith.constant 0 : index
    %c0_10 = arith.constant 0 : index
    %10 = vector.load %arg7[%9, %c0_9, %c0_10] : memref<4x32x8xf32, #tpu.memory_space<vmem>>, vector<1x32x8xf32>
    %11 = vector.shape_cast %10 : vector<1x32x8xf32> to vector<32x8xf32>
    %12 = arith.index_cast %arg2 : i32 to index
    %c0_11 = arith.constant 0 : index
    %c0_12 = arith.constant 0 : index
    %13 = vector.load %arg9[%12, %c0_11, %c0_12] : memref<4x32x8xf32, #tpu.memory_space<vmem>>, vector<1x32x8xf32>
    %14 = vector.shape_cast %13 : vector<1x32x8xf32> to vector<32x8xf32>
    %15 = arith.index_cast %arg2 : i32 to index
    %c0_13 = arith.constant 0 : index
    %c0_14 = arith.constant 0 : index
    %16 = vector.load %arg11[%15, %c0_13, %c0_14] : memref<4x32x8xf32, #tpu.memory_space<vmem>>, vector<1x32x8xf32>
    %17 = vector.shape_cast %16 : vector<1x32x8xf32> to vector<32x8xf32>
    %18 = arith.index_cast %arg2 : i32 to index
    %c0_15 = arith.constant 0 : index
    %c0_16 = arith.constant 0 : index
    %19 = vector.load %arg13[%18, %c0_15, %c0_16] : memref<4x8x32xf32, #tpu.memory_space<vmem>>, vector<1x8x32xf32>
    %20 = vector.shape_cast %19 : vector<1x8x32xf32> to vector<8x32xf32>
    %21 = arith.index_cast %arg2 : i32 to index
    %c0_17 = arith.constant 0 : index
    %c0_18 = arith.constant 0 : index
    %22 = vector.load %arg8[%21, %c0_17, %c0_18] : memref<4x1x8xf32, #tpu.memory_space<vmem>>, vector<1x1x8xf32>
    %23 = vector.shape_cast %22 : vector<1x1x8xf32> to vector<1x8xf32>
    %24 = arith.index_cast %arg2 : i32 to index
    %c0_19 = arith.constant 0 : index
    %c0_20 = arith.constant 0 : index
    %25 = vector.load %arg10[%24, %c0_19, %c0_20] : memref<4x1x8xf32, #tpu.memory_space<vmem>>, vector<1x1x8xf32>
    %26 = vector.shape_cast %25 : vector<1x1x8xf32> to vector<1x8xf32>
    %27 = arith.index_cast %arg2 : i32 to index
    %c0_21 = arith.constant 0 : index
    %c0_22 = arith.constant 0 : index
    %28 = vector.load %arg12[%27, %c0_21, %c0_22] : memref<4x1x8xf32, #tpu.memory_space<vmem>>, vector<1x1x8xf32>
    %29 = vector.shape_cast %28 : vector<1x1x8xf32> to vector<1x8xf32>
    %cst = arith.constant dense<0.000000e+00> : vector<16x8xf32>
    %30 = tpu.matmul %4, %11, %cst {dimension_numbers = #tpu.dot_dimension_numbers<[1], [0], [0], [1], [0, 0, 1, 1], [], []>} : vector<16x32xf32>, vector<32x8xf32>, vector<16x8xf32> -> vector<16x8xf32>
    %31 = vector.broadcast %23 : vector<1x8xf32> to vector<16x8xf32>
    %32 = arith.addf %30, %31 : vector<16x8xf32>
    %cst_23 = arith.constant 0.353553385 : f32
    %33 = vector.broadcast %cst_23 : f32 to vector<16x8xf32>
    %34 = arith.mulf %32, %33 : vector<16x8xf32>
    %cst_24 = arith.constant dense<0.000000e+00> : vector<16x8xf32>
    %35 = tpu.matmul %6, %14, %cst_24 {dimension_numbers = #tpu.dot_dimension_numbers<[1], [0], [0], [1], [0, 0, 1, 1], [], []>} : vector<16x32xf32>, vector<32x8xf32>, vector<16x8xf32> -> vector<16x8xf32>
    %36 = vector.broadcast %26 : vector<1x8xf32> to vector<16x8xf32>
    %37 = arith.addf %35, %36 : vector<16x8xf32>
    %cst_25 = arith.constant dense<0.000000e+00> : vector<16x8xf32>
    %38 = tpu.matmul %8, %17, %cst_25 {dimension_numbers = #tpu.dot_dimension_numbers<[1], [0], [0], [1], [0, 0, 1, 1], [], []>} : vector<16x32xf32>, vector<32x8xf32>, vector<16x8xf32> -> vector<16x8xf32>
    %39 = vector.broadcast %29 : vector<1x8xf32> to vector<16x8xf32>
    %40 = arith.addf %38, %39 : vector<16x8xf32>
    %cst_26 = arith.constant dense<0.000000e+00> : vector<16x16xf32>
    %41 = tpu.matmul %34, %37, %cst_26 {dimension_numbers = #tpu.dot_dimension_numbers<[1], [1], [0], [0], [0, 0, 1, 0], [], []>} : vector<16x8xf32>, vector<16x8xf32>, vector<16x16xf32> -> vector<16x16xf32>
    %c0_27 = arith.constant 0 : index
    %c0_28 = arith.constant 0 : index
    %c0_29 = arith.constant 0 : index
    %42 = vector.load %arg6[%c0_27, %c0_28, %c0_29] : memref<1x16x16xf32, #tpu.memory_space<vmem>>, vector<1x16x16xf32>
    %43 = vector.shape_cast %42 : vector<1x16x16xf32> to vector<16x16xf32>
    %44 = arith.addf %41, %43 : vector<16x16xf32>
    %cst_30 = arith.constant dense<0xFF800000> : vector<16xf32>
    %45 = vector.multi_reduction <maximumf>, %44, %cst_30 [1] : vector<16x16xf32> to vector<16xf32>
    %46 = vector.shape_cast %45 : vector<16xf32> to vector<16x1xf32>
    %47 = vector.broadcast %46 : vector<16x1xf32> to vector<16x16xf32>
    %48 = arith.subf %44, %47 : vector<16x16xf32>
    %49 = math.exp %48 : vector<16x16xf32>
    %cst_31 = arith.constant dense<0.000000e+00> : vector<16xf32>
    %50 = vector.multi_reduction <add>, %49, %cst_31 [1] : vector<16x16xf32> to vector<16xf32>
    %51 = vector.shape_cast %50 : vector<16xf32> to vector<16x1xf32>
    %cst_32 = arith.constant dense<0.000000e+00> : vector<16x8xf32>
    %52 = tpu.matmul %49, %40, %cst_32 {dimension_numbers = #tpu.dot_dimension_numbers<[1], [0], [0], [1], [0, 0, 1, 1], [], []>} : vector<16x16xf32>, vector<16x8xf32>, vector<16x8xf32> -> vector<16x8xf32>
    %53 = tpu.reciprocal %51 {approx = true} : vector<16x1xf32> -> vector<16x1xf32>
    %54 = vector.broadcast %53 : vector<16x1xf32> to vector<16x8xf32>
    %55 = arith.mulf %52, %54 : vector<16x8xf32>
    %cst_33 = arith.constant dense<0.000000e+00> : vector<16x32xf32>
    %56 = tpu.matmul %55, %20, %cst_33 {dimension_numbers = #tpu.dot_dimension_numbers<[1], [0], [0], [1], [0, 0, 1, 1], [], []>} : vector<16x8xf32>, vector<8x32xf32>, vector<16x32xf32> -> vector<16x32xf32>
    %c0_34 = arith.constant 0 : index
    %c0_35 = arith.constant 0 : index
    %c0_36 = arith.constant 0 : index
    %57 = vector.load %arg15[%c0_34, %c0_35, %c0_36] : memref<1x16x32xf32, #tpu.memory_space<vmem>>, vector<1x16x32xf32>
    %58 = vector.shape_cast %56 : vector<16x32xf32> to vector<1x16x32xf32>
    %59 = arith.addf %57, %58 : vector<1x16x32xf32>
    %c0_37 = arith.constant 0 : index
    %c0_38 = arith.constant 0 : index
    %c0_39 = arith.constant 0 : index
    %60 = vector.load %arg15[%c0_37, %c0_38, %c0_39] : memref<1x16x32xf32, #tpu.memory_space<vmem>>, vector<1x16x32xf32>
    tpu.vector_store %arg15[%c0_37, %c0_38, %c0_39], %59 {strides = array<i32>} : memref<1x16x32xf32, #tpu.memory_space<vmem>>, vector<1x16x32xf32>,
    return
  }
  func.func @transform_0(%arg0: i32, %arg1: i32, %arg2: i32) -> (i32, i32, i32) {
    %c0_i32 = arith.constant 0 : i32
    %c0_i32_0 = arith.constant 0 : i32
    return %arg0, %arg1, %c0_i32 : i32, i32, i32
  }
  func.func @transform_1(%arg0: i32, %arg1: i32, %arg2: i32) -> (i32, i32, i32) {
    %c0_i32 = arith.constant 0 : i32
    %c0_i32_0 = arith.constant 0 : i32
    %c0_i32_1 = arith.constant 0 : i32
    return %arg0, %c0_i32, %c0_i32_0 : i32, i32, i32
  }
  func.func @transform_2(%arg0: i32, %arg1: i32, %arg2: i32) -> (i32, i32, i32) {
    %c0_i32 = arith.constant 0 : i32
    %c0_i32_0 = arith.constant 0 : i32
    %c0_i32_1 = arith.constant 0 : i32
    return %arg0, %c0_i32, %c0_i32_0 : i32, i32, i32
  }
  func.func @transform_3(%arg0: i32, %arg1: i32, %arg2: i32) -> (i32, i32, i32) {
    %c0_i32 = arith.constant 0 : i32
    %c0_i32_0 = arith.constant 0 : i32
    return %arg0, %arg1, %c0_i32 : i32, i32, i32
  }
  func.func @transform_4(%arg0: i32, %arg1: i32, %arg2: i32) -> (i32, i32, i32) {
    %c0_i32 = arith.constant 0 : i32
    %c0_i32_0 = arith.constant 0 : i32
    %c0_i32_1 = arith.constant 0 : i32
    %c0_i32_2 = arith.constant 0 : i32
    return %c0_i32, %c0_i32_0, %c0_i32_1 : i32, i32, i32
  }
  func.func @transform_5(%arg0: i32, %arg1: i32, %arg2: i32) -> (i32, i32, i32) {
    %c0_i32 = arith.constant 0 : i32
    %c0_i32_0 = arith.constant 0 : i32
    %c0_i32_1 = arith.constant 0 : i32
    %c0_i32_2 = arith.constant 0 : i32
    return %c0_i32, %c0_i32_0, %c0_i32_1 : i32, i32, i32
  }
  func.func @transform_6(%arg0: i32, %arg1: i32, %arg2: i32) -> (i32, i32, i32) {
    %c0_i32 = arith.constant 0 : i32
    %c0_i32_0 = arith.constant 0 : i32
    %c0_i32_1 = arith.constant 0 : i32
    %c0_i32_2 = arith.constant 0 : i32
    return %c0_i32, %c0_i32_0, %c0_i32_1 : i32, i32, i32
  }
  func.func @transform_7(%arg0: i32, %arg1: i32, %arg2: i32) -> (i32, i32, i32) {
    %c0_i32 = arith.constant 0 : i32
    %c0_i32_0 = arith.constant 0 : i32
    %c0_i32_1 = arith.constant 0 : i32
    %c0_i32_2 = arith.constant 0 : i32
    return %c0_i32, %c0_i32_0, %c0_i32_1 : i32, i32, i32
  }
  func.func @transform_8(%arg0: i32, %arg1: i32, %arg2: i32) -> (i32, i32, i32) {
    %c0_i32 = arith.constant 0 : i32
    %c0_i32_0 = arith.constant 0 : i32
    %c0_i32_1 = arith.constant 0 : i32
    %c0_i32_2 = arith.constant 0 : i32
    return %c0_i32, %c0_i32_0, %c0_i32_1 : i32, i32, i32
  }
  func.func @transform_9(%arg0: i32, %arg1: i32, %arg2: i32) -> (i32, i32, i32) {
    %c0_i32 = arith.constant 0 : i32
    %c0_i32_0 = arith.constant 0 : i32
    %c0_i32_1 = arith.constant 0 : i32
    %c0_i32_2 = arith.constant 0 : i32
    return %c0_i32, %c0_i32_0, %c0_i32_1 : i32, i32, i32
  }
  func.func @transform_10(%arg0: i32, %arg1: i32, %arg2: i32) -> (i32, i32, i32) {
    %c0_i32 = arith.constant 0 : i32
    %c0_i32_0 = arith.constant 0 : i32
    %c0_i32_1 = arith.constant 0 : i32
    %c0_i32_2 = arith.constant 0 : i32
    return %c0_i32, %c0_i32_0, %c0_i32_1 : i32, i32, i32
  }
  func.func @transform_11(%arg0: i32, %arg1: i32, %arg2: i32) -> (i32, i32) {
    %c0_i32 = arith.constant 0 : i32
    %c0_i32_0 = arith.constant 0 : i32
    %c0_i32_1 = arith.constant 0 : i32
    return %c0_i32, %c0_i32_0 : i32, i32
  }
  func.func @transform_12(%arg0: i32, %arg1: i32, %arg2: i32) -> (i32, i32, i32) {
    %c0_i32 = arith.constant 0 : i32
    %c0_i32_0 = arith.constant 0 : i32
    return %arg0, %arg1, %c0_i32 : i32, i32, i32
  }
}

</mosaic_0001>

<llo_original>
// kernel: tpu_custom_call.1
$region0: #{tpu_custom_call.1}
  #allocation0 [shape = 'u32[]', space=smem, size = 0x4, offset = 0x4, fixed_abs, tag = 'smem constant byte address 0x4 - core index']
  #allocation1 [shape = 'u32[144,128]{1,0:T(1,128)}', space=vmem, size = 0x12000, scoped, tag = 'internal scratch']
  %s0 = inlined_call_operand.hbm [shape: f32[2,16,32], index: 0, kind: input, shape index: {}]
  %s1 = inlined_call_operand.hbm [shape: f32[2,16,32], index: 1, kind: input, shape index: {}]
  %s2 = inlined_call_operand.hbm [shape: f32[2,16,32], index: 2, kind: input, shape index: {}]
  %s3 = inlined_call_operand.hbm [shape: f32[2,16,16], index: 3, kind: input, shape index: {}]
  %s4 = inlined_call_operand.hbm [shape: f32[4,32,8], index: 4, kind: input, shape index: {}]
  %s5 = inlined_call_operand.hbm [shape: f32[4,1,8], index: 5, kind: input, shape index: {}]
  %s6 = inlined_call_operand.hbm [shape: f32[4,32,8], index: 6, kind: input, shape index: {}]
  %s7 = inlined_call_operand.hbm [shape: f32[4,1,8], index: 7, kind: input, shape index: {}]
  %s8 = inlined_call_operand.hbm [shape: f32[4,32,8], index: 8, kind: input, shape index: {}]
  %s9 = inlined_call_operand.hbm [shape: f32[4,1,8], index: 9, kind: input, shape index: {}]
  %s10 = inlined_call_operand.hbm [shape: f32[4,8,32], index: 10, kind: input, shape index: {}]
  %s11 = inlined_call_operand.hbm [shape: f32[1,32], index: 11, kind: input, shape index: {}]
  %s12 = inlined_call_operand.hbm [shape: f32[2,16,32], index: 12, kind: output, shape index: {}]
  %s13 = sld [smem:[#allocation0]]
  $region133: #{tpu_custom_call.1} parent=0
    _
  %s15 = ssub.s32 1, %s13
  %s16 = scalar_select 0, %s15, %s13
  $region1: #{tpu_custom_call.1} parent=0
    #allocation2 [shape = 'u8[16384]{0}', space=vmem, size = 0x4000, scoped, tag = 'input window, operand 0']
    #allocation3 [shape = 's32[2]{0}', space=sflag, size = 0x8, scoped, tag = 'scoped memory for tpu_custom_call.1']
    #allocation4 [shape = 's32[2]{0}', space=sflag, size = 0x8, scoped, tag = 'scoped memory for tpu_custom_call.1']
    #allocation5 [shape = 'u8[16384]{0}', space=vmem, size = 0x4000, scoped, tag = 'input window, operand 1']
    #allocation6 [shape = 's32[2]{0}', space=sflag, size = 0x8, scoped, tag = 'scoped memory for tpu_custom_call.1']
    #allocation7 [shape = 'u8[16384]{0}', space=vmem, size = 0x4000, scoped, tag = 'input window, operand 2']
    #allocation8 [shape = 'u8[16384]{0}', space=vmem, size = 0x4000, scoped, tag = 'input window, operand 3']
    #allocation9 [shape = 's32[2]{0}', space=sflag, size = 0x8, scoped, tag = 'scoped memory for tpu_custom_call.1']
    #allocation10 [shape = 'u8[65536]{0}', space=vmem, size = 0x10000, scoped, tag = 'input window, operand 4, single buffered']
    #allocation11 [shape = 'u8[2048]{0}', space=vmem, size = 0x800, scoped, tag = 'input window, operand 5, single buffered']
    #allocation12 [shape = 's32[1]{0}', space=sflag, size = 0x4, scoped, tag = 'scoped memory for tpu_custom_call.1']
    #allocation13 [shape = 'u8[65536]{0}', space=vmem, size = 0x10000, scoped, tag = 'input window, operand 6, single buffered']
    #allocation14 [shape = 'u8[2048]{0}', space=vmem, size = 0x800, scoped, tag = 'input window, operand 7, single buffered']
    #allocation15 [shape = 's32[1]{0}', space=sflag, size = 0x4, scoped, tag = 'scoped memory for tpu_custom_call.1']
    #allocation16 [shape = 'u8[65536]{0}', space=vmem, size = 0x10000, scoped, tag = 'input window, operand 8, single buffered']
    #allocation17 [shape = 'u8[2048]{0}', space=vmem, size = 0x800, scoped, tag = 'input window, operand 9, single buffered']
    #allocation18 [shape = 's32[1]{0}', space=sflag, size = 0x4, scoped, tag = 'scoped memory for tpu_custom_call.1']
    #allocation19 [shape = 'u8[16384]{0}', space=vmem, size = 0x4000, scoped, tag = 'input window, operand 10, single buffered']
    #allocation20 [shape = 'u8[512]{0}', space=vmem, size = 0x400, scoped, tag = 'input window, operand 11, single buffered']
    #allocation21 [shape = 's32[1]{0}', space=sflag, size = 0x4, scoped, tag = 'scoped memory for tpu_custom_call.1']
    #allocation22 [shape = 'u8[16384]{0}', space=vmem, size = 0x4000, scoped, tag = 'output window, operand 0']
    %17 = vsyncpa [#allocation3], 0
    %s18 = scalar_lea.sflag [#allocation3], 1
    %19 = vsyncpa %s18, 0
    %20 = vsyncpa [#allocation6], 0
    %s21 = scalar_lea.sflag [#allocation6], 1
    %22 = vsyncpa %s21, 0
    %23 = vsyncpa [#allocation9], 0
    %s24 = scalar_lea.sflag [#allocation9], 1
    %25 = vsyncpa %s24, 0
    %26 = vsyncpa [#allocation12], 0
    %27 = vsyncpa [#allocation15], 0
    %28 = vsyncpa [#allocation18], 0
    %29 = vsyncpa [#allocation21], 0
    %30 = vsyncpa [#allocation4], 0
    %s31 = scalar_lea.sflag [#allocation4], 1
    %32 = vsyncpa %s31, 0
    loop: start=0, step=1, limit=10
    $region2: #{tpu_custom_call.1} parent=1 // loop_pre_header
      _
    $region3: #{tpu_custom_call.1} parent=1 // loop_header
      %s34 = sphi 0, %s38
      %p35 = scmp.ge.s32.totalorder %s34, 10
      %s41 = sphi 0, %s60
      %s42 = sphi 0, %s56
      %s43 = sphi 0, %s52
      %s44 = sphi 0, %s41
      %s45 = sphi 0, %s42
      %s46 = sphi 0, %s43
      %s47 = sphi 0, %s44
      %s48 = sphi 0, %s45
      %s49 = sphi 0, %s46
      %s65 = sphi 0, %s67
      %s68 = sphi 0, %s65
      %s69 = sphi 0, %s68
      %s85 = sphi 0, %s69
      %s91 = sphi 0, %s93
      %s94 = sphi 0, %s91
      %s95 = sphi 0, %s94
      %s111 = sphi 0, %s95
      %s117 = sphi 0, %s119
      %s120 = sphi 0, %s117
      %s121 = sphi 0, %s120
      %s137 = sphi 0, %s121
      %s145 = sphi 0, %s147
      %s148 = sphi 0, %s145
      %s149 = sphi 0, %s148
      %s165 = sphi 0, %s149
      %s169 = sphi 0, %s169
      %s171 = sphi 0, %s169
      %s172 = sphi 0, %s171
      %s186 = sphi 0, %s172
      %s190 = sphi 0, %s190
      %s192 = sphi 0, %s190
      %s193 = sphi 0, %s192
      %s207 = sphi 0, %s193
      %s211 = sphi 0, %s211
      %s213 = sphi 0, %s211
      %s214 = sphi 0, %s213
      %s228 = sphi 0, %s214
      %s232 = sphi 0, %s232
      %s234 = sphi 0, %s232
      %s235 = sphi 0, %s234
      %s249 = sphi 0, %s235
      %s253 = sphi 0, %s253
      %s255 = sphi 0, %s253
      %s256 = sphi 0, %s255
      %s270 = sphi 0, %s256
      %s274 = sphi 0, %s274
      %s276 = sphi 0, %s274
      %s277 = sphi 0, %s276
      %s291 = sphi 0, %s277
      %s295 = sphi 0, %s295
      %s297 = sphi 0, %s295
      %s298 = sphi 0, %s297
      %s312 = sphi 0, %s298
      %s316 = sphi 0, %s316
      %s318 = sphi 0, %s316
      %s319 = sphi 0, %s318
      %s333 = sphi 0, %s319
      %s341 = sphi 0, %s343
      %s344 = sphi 0, %s341
      %s345 = sphi 0, %s344
      %s361 = sphi 0, %s345
    $region4: #{tpu_custom_call.1} parent=1 // loop_header_branch
      %37 = sbr.rel (%p35) target = $region8
    $region5: #{tpu_custom_call.1} parent=1 // loop_body
      %s39 = ssub.s32 %s34, 1
      %s40 = ssub.s32 %s34, 2
      %s50 = sadd.s32 1, %s43
      %p51 = scmp.ge.s32.totalorder %s50, 4
      %s52 = scalar_select %p51, 0, %s50
      %s53 = sadd.s32 1, %s42
      %s54 = scalar_select %p51, %s53, %s42
      %p55 = scmp.ge.s32.totalorder %s54, 1
      %s56 = scalar_select %p55, 0, %s54
      %s57 = sadd.s32 1, %s41
      %s58 = scalar_select %p55, %s57, %s41
      %p59 = scmp.ge.s32.totalorder %s58, 2
      %s60 = scalar_select %p59, 0, %s58
      %s61 = ssub.s32 %s41, %s60
      %s62 = ssub.s32 %s42, %s56
      %s63 = sor.u32 %s61, %s62
      %p64 = scmp.eq.s32.totalorder %s63, 0
      %s66 = sadd.s32 %s65, 1
      %s67 = scalar_select %p64, %s65, %s66
      %p70 = pneg %p64
      %p71 = scmp.eq.s32.totalorder %s34, 7
      %p72 = por %p70, %p71
      %p73 = scmp.ne.s32.totalorder %s65, %s68
      %p74 = scmp.eq.s32.totalorder %s34, 0
      %p75 = por %p73, %p74
      %p76 = scmp.ne.s32.totalorder %s65, %s68
      %p77 = scmp.eq.s32.totalorder %s39, 7
      %p78 = por %p76, %p77
      %p79 = scmp.ne.s32.totalorder %s68, %s69
      %p80 = scmp.eq.s32.totalorder %s39, 0
      %p81 = por %p79, %p80
      %p82 = scmp.ne.s32.totalorder %s68, %s69
      %p83 = scmp.eq.s32.totalorder %s40, 7
      %p84 = por %p82, %p83
      %p86 = scmp.ne.s32.totalorder %s69, %s85
      %p87 = scmp.eq.s32.totalorder %s40, 0
      %p88 = por %p86, %p87
      %s89 = ssub.s32 %s41, %s60
      %p90 = scmp.eq.s32.totalorder %s89, 0
      %s92 = sadd.s32 %s91, 1
      %s93 = scalar_select %p90, %s91, %s92
      %p96 = pneg %p90
      %p97 = scmp.eq.s32.totalorder %s34, 7
      %p98 = por %p96, %p97
      %p99 = scmp.ne.s32.totalorder %s91, %s94
      %p100 = scmp.eq.s32.totalorder %s34, 0
      %p101 = por %p99, %p100
      %p102 = scmp.ne.s32.totalorder %s91, %s94
      %p103 = scmp.eq.s32.totalorder %s39, 7
      %p104 = por %p102, %p103
      %p105 = scmp.ne.s32.totalorder %s94, %s95
      %p106 = scmp.eq.s32.totalorder %s39, 0
      %p107 = por %p105, %p106
      %p108 = scmp.ne.s32.totalorder %s94, %s95
      %p109 = scmp.eq.s32.totalorder %s40, 7
      %p110 = por %p108, %p109
      %p112 = scmp.ne.s32.totalorder %s95, %s111
      %p113 = scmp.eq.s32.totalorder %s40, 0
      %p114 = por %p112, %p113
      %s115 = ssub.s32 %s41, %s60
      %p116 = scmp.eq.s32.totalorder %s115, 0
      %s118 = sadd.s32 %s117, 1
      %s119 = scalar_select %p116, %s117, %s118
      %p122 = pneg %p116
      %p123 = scmp.eq.s32.totalorder %s34, 7
      %p124 = por %p122, %p123
      %p125 = scmp.ne.s32.totalorder %s117, %s120
      %p126 = scmp.eq.s32.totalorder %s34, 0
      %p127 = por %p125, %p126
      %p128 = scmp.ne.s32.totalorder %s117, %s120
      %p129 = scmp.eq.s32.totalorder %s39, 7
      %p130 = por %p128, %p129
      %p131 = scmp.ne.s32.totalorder %s120, %s121
      %p132 = scmp.eq.s32.totalorder %s39, 0
      %p133 = por %p131, %p132
      %p134 = scmp.ne.s32.totalorder %s120, %s121
      %p135 = scmp.eq.s32.totalorder %s40, 7
      %p136 = por %p134, %p135
      %p138 = scmp.ne.s32.totalorder %s121, %s137
      %p139 = scmp.eq.s32.totalorder %s40, 0
      %p140 = por %p138, %p139
      %s141 = ssub.s32 %s41, %s60
      %s142 = ssub.s32 %s42, %s56
      %s143 = sor.u32 %s141, %s142
      %p144 = scmp.eq.s32.totalorder %s143, 0
      %s146 = sadd.s32 %s145, 1
      %s147 = scalar_select %p144, %s145, %s146
      %p150 = pneg %p144
      %p151 = scmp.eq.s32.totalorder %s34, 7
      %p152 = por %p150, %p151
      %p153 = scmp.ne.s32.totalorder %s145, %s148
      %p154 = scmp.eq.s32.totalorder %s34, 0
      %p155 = por %p153, %p154
      %p156 = scmp.ne.s32.totalorder %s145, %s148
      %p157 = scmp.eq.s32.totalorder %s39, 7
      %p158 = por %p156, %p157
      %p159 = scmp.ne.s32.totalorder %s148, %s149
      %p160 = scmp.eq.s32.totalorder %s39, 0
      %p161 = por %p159, %p160
      %p162 = scmp.ne.s32.totalorder %s148, %s149
      %p163 = scmp.eq.s32.totalorder %s40, 7
      %p164 = por %p162, %p163
      %p166 = scmp.ne.s32.totalorder %s149, %s165
      %p167 = scmp.eq.s32.totalorder %s40, 0
      %p168 = por %p166, %p167
      %s170 = sadd.s32 %s169, 1
      %p173 = scmp.eq.s32.totalorder %s34, 7
      %p174 = scmp.ne.s32.totalorder %s169, %s171
      %p175 = scmp.eq.s32.totalorder %s34, 0
      %p176 = por %p174, %p175
      %p177 = scmp.ne.s32.totalorder %s169, %s171
      %p178 = scmp.eq.s32.totalorder %s39, 7
      %p179 = por %p177, %p178
      %p180 = scmp.ne.s32.totalorder %s171, %s172
      %p181 = scmp.eq.s32.totalorder %s39, 0
      %p182 = por %p180, %p181
      %p183 = scmp.ne.s32.totalorder %s171, %s172
      %p184 = scmp.eq.s32.totalorder %s40, 7
      %p185 = por %p183, %p184
      %p187 = scmp.ne.s32.totalorder %s172, %s186
      %p188 = scmp.eq.s32.totalorder %s40, 0
      %p189 = por %p187, %p188
      %s191 = sadd.s32 %s190, 1
      %p194 = scmp.eq.s32.totalorder %s34, 7
      %p195 = scmp.ne.s32.totalorder %s190, %s192
      %p196 = scmp.eq.s32.totalorder %s34, 0
      %p197 = por %p195, %p196
      %p198 = scmp.ne.s32.totalorder %s190, %s192
      %p199 = scmp.eq.s32.totalorder %s39, 7
      %p200 = por %p198, %p199
      %p201 = scmp.ne.s32.totalorder %s192, %s193
      %p202 = scmp.eq.s32.totalorder %s39, 0
      %p203 = por %p201, %p202
      %p204 = scmp.ne.s32.totalorder %s192, %s193
      %p205 = scmp.eq.s32.totalorder %s40, 7
      %p206 = por %p204, %p205
      %p208 = scmp.ne.s32.totalorder %s193, %s207
      %p209 = scmp.eq.s32.totalorder %s40, 0
      %p210 = por %p208, %p209
      %s212 = sadd.s32 %s211, 1
      %p215 = scmp.eq.s32.totalorder %s34, 7
      %p216 = scmp.ne.s32.totalorder %s211, %s213
      %p217 = scmp.eq.s32.totalorder %s34, 0
      %p218 = por %p216, %p217
      %p219 = scmp.ne.s32.totalorder %s211, %s213
      %p220 = scmp.eq.s32.totalorder %s39, 7
      %p221 = por %p219, %p220
      %p222 = scmp.ne.s32.totalorder %s213, %s214
      %p223 = scmp.eq.s32.totalorder %s39, 0
      %p224 = por %p222, %p223
      %p225 = scmp.ne.s32.totalorder %s213, %s214
      %p226 = scmp.eq.s32.totalorder %s40, 7
      %p227 = por %p225, %p226
      %p229 = scmp.ne.s32.totalorder %s214, %s228
      %p230 = scmp.eq.s32.totalorder %s40, 0
      %p231 = por %p229, %p230
      %s233 = sadd.s32 %s232, 1
      %p236 = scmp.eq.s32.totalorder %s34, 7
      %p237 = scmp.ne.s32.totalorder %s232, %s234
      %p238 = scmp.eq.s32.totalorder %s34, 0
      %p239 = por %p237, %p238
      %p240 = scmp.ne.s32.totalorder %s232, %s234
      %p241 = scmp.eq.s32.totalorder %s39, 7
      %p242 = por %p240, %p241
      %p243 = scmp.ne.s32.totalorder %s234, %s235
      %p244 = scmp.eq.s32.totalorder %s39, 0
      %p245 = por %p243, %p244
      %p246 = scmp.ne.s32.totalorder %s234, %s235
      %p247 = scmp.eq.s32.totalorder %s40, 7
      %p248 = por %p246, %p247
      %p250 = scmp.ne.s32.totalorder %s235, %s249
      %p251 = scmp.eq.s32.totalorder %s40, 0
      %p252 = por %p250, %p251
      %s254 = sadd.s32 %s253, 1
      %p257 = scmp.eq.s32.totalorder %s34, 7
      %p258 = scmp.ne.s32.totalorder %s253, %s255
      %p259 = scmp.eq.s32.totalorder %s34, 0
      %p260 = por %p258, %p259
      %p261 = scmp.ne.s32.totalorder %s253, %s255
      %p262 = scmp.eq.s32.totalorder %s39, 7
      %p263 = por %p261, %p262
      %p264 = scmp.ne.s32.totalorder %s255, %s256
      %p265 = scmp.eq.s32.totalorder %s39, 0
      %p266 = por %p264, %p265
      %p267 = scmp.ne.s32.totalorder %s255, %s256
      %p268 = scmp.eq.s32.totalorder %s40, 7
      %p269 = por %p267, %p268
      %p271 = scmp.ne.s32.totalorder %s256, %s270
      %p272 = scmp.eq.s32.totalorder %s40, 0
      %p273 = por %p271, %p272
      %s275 = sadd.s32 %s274, 1
      %p278 = scmp.eq.s32.totalorder %s34, 7
      %p279 = scmp.ne.s32.totalorder %s274, %s276
      %p280 = scmp.eq.s32.totalorder %s34, 0
      %p281 = por %p279, %p280
      %p282 = scmp.ne.s32.totalorder %s274, %s276
      %p283 = scmp.eq.s32.totalorder %s39, 7
      %p284 = por %p282, %p283
      %p285 = scmp.ne.s32.totalorder %s276, %s277
      %p286 = scmp.eq.s32.totalorder %s39, 0
      %p287 = por %p285, %p286
      %p288 = scmp.ne.s32.totalorder %s276, %s277
      %p289 = scmp.eq.s32.totalorder %s40, 7
      %p290 = por %p288, %p289
      %p292 = scmp.ne.s32.totalorder %s277, %s291
      %p293 = scmp.eq.s32.totalorder %s40, 0
      %p294 = por %p292, %p293
      %s296 = sadd.s32 %s295, 1
      %p299 = scmp.eq.s32.totalorder %s34, 7
      %p300 = scmp.ne.s32.totalorder %s295, %s297
      %p301 = scmp.eq.s32.totalorder %s34, 0
      %p302 = por %p300, %p301
      %p303 = scmp.ne.s32.totalorder %s295, %s297
      %p304 = scmp.eq.s32.totalorder %s39, 7
      %p305 = por %p303, %p304
      %p306 = scmp.ne.s32.totalorder %s297, %s298
      %p307 = scmp.eq.s32.totalorder %s39, 0
      %p308 = por %p306, %p307
      %p309 = scmp.ne.s32.totalorder %s297, %s298
      %p310 = scmp.eq.s32.totalorder %s40, 7
      %p311 = por %p309, %p310
      %p313 = scmp.ne.s32.totalorder %s298, %s312
      %p314 = scmp.eq.s32.totalorder %s40, 0
      %p315 = por %p313, %p314
      %s317 = sadd.s32 %s316, 1
      %p320 = scmp.eq.s32.totalorder %s34, 7
      %p321 = scmp.ne.s32.totalorder %s316, %s318
      %p322 = scmp.eq.s32.totalorder %s34, 0
      %p323 = por %p321, %p322
      %p324 = scmp.ne.s32.totalorder %s316, %s318
      %p325 = scmp.eq.s32.totalorder %s39, 7
      %p326 = por %p324, %p325
      %p327 = scmp.ne.s32.totalorder %s318, %s319
      %p328 = scmp.eq.s32.totalorder %s39, 0
      %p329 = por %p327, %p328
      %p330 = scmp.ne.s32.totalorder %s318, %s319
      %p331 = scmp.eq.s32.totalorder %s40, 7
      %p332 = por %p330, %p331
      %p334 = scmp.ne.s32.totalorder %s319, %s333
      %p335 = scmp.eq.s32.totalorder %s40, 0
      %p336 = por %p334, %p335
      %s337 = ssub.s32 %s41, %s60
      %s338 = ssub.s32 %s42, %s56
      %s339 = sor.u32 %s337, %s338
      %p340 = scmp.eq.s32.totalorder %s339, 0
      %s342 = sadd.s32 %s341, 1
      %s343 = scalar_select %p340, %s341, %s342
      %p346 = pneg %p340
      %p347 = scmp.eq.s32.totalorder %s34, 7
      %p348 = por %p346, %p347
      %p349 = scmp.ne.s32.totalorder %s341, %s344
      %p350 = scmp.eq.s32.totalorder %s34, 0
      %p351 = por %p349, %p350
      %p352 = scmp.ne.s32.totalorder %s341, %s344
      %p353 = scmp.eq.s32.totalorder %s39, 7
      %p354 = por %p352, %p353
      %p355 = scmp.ne.s32.totalorder %s344, %s345
      %p356 = scmp.eq.s32.totalorder %s39, 0
      %p357 = por %p355, %p356
      %p358 = scmp.ne.s32.totalorder %s344, %s345
      %p359 = scmp.eq.s32.totalorder %s40, 7
      %p360 = por %p358, %p359
      %p362 = scmp.ne.s32.totalorder %s345, %s361
      %p363 = scmp.eq.s32.totalorder %s40, 0
      %p364 = por %p362, %p363
      %p365 = scmp.le.s32.totalorder 1, %s34
      %p366 = scmp.lt.s32.totalorder %s34, 9
      %p367 = pnand %p365, %p366
      %p368 = pneg %p367
      // Predicated region
      $region9: #{tpu_custom_call.1} parent=5 // pred_check
        _
      $region10: #{tpu_custom_call.1} parent=5 // pred_check_branch
        %370 = sbr.rel (%p367) target = $region12
      $region11: #{tpu_custom_call.1} parent=5 // pred_region
        %s371 = ssub.s32 %s34, 1
        // Predicated region
        $region13: #{tpu_custom_call.1} parent=11 // pred_check
          %p372 = pneg %p182
        $region14: #{tpu_custom_call.1} parent=11 // pred_check_branch
          %374 = sbr.rel (%p372) target = $region16
        $region15: #{tpu_custom_call.1} parent=11 // pred_region
          %s376 = ssub.s32 2048, 2048
          %377 = vsyncadd [#allocation9], %s376
          %s378 = sshll.u32 [#allocation10], 4
          %s379 = int_to_ptr.vmem [resolvable:$true] %s378
          %384 = dma.hbm_to_vmem [thread:$0]  %s4, 2048, %s379, [#allocation9], 128, 128, 8
        $region16: #{tpu_custom_call.1} parent=11 // pred_fallthru
          _
        // Predicated region
        $region17: #{tpu_custom_call.1} parent=11 // pred_check
          %p385 = pneg %p203
        $region18: #{tpu_custom_call.1} parent=11 // pred_check_branch
          %387 = sbr.rel (%p385) target = $region20
        $region19: #{tpu_custom_call.1} parent=11 // pred_region
          %s389 = ssub.s32 64, 64
          %390 = vsyncadd [#allocation12], %s389
          %s391 = sshll.u32 [#allocation11], 4
          %s392 = int_to_ptr.vmem [resolvable:$true] %s391
          %397 = dma.hbm_to_vmem [thread:$0]  %s5, 64, %s392, [#allocation12], 16, 16, 1
        $region20: #{tpu_custom_call.1} parent=11 // pred_fallthru
          _
        // Predicated region
        $region21: #{tpu_custom_call.1} parent=11 // pred_check
          %p398 = pneg %p224
        $region22: #{tpu_custom_call.1} parent=11 // pred_check_branch
          %400 = sbr.rel (%p398) target = $region24
        $region23: #{tpu_custom_call.1} parent=11 // pred_region
          %s402 = ssub.s32 2048, 2048
          %403 = vsyncadd [#allocation12], %s402
          %s404 = sshll.u32 [#allocation13], 4
          %s405 = int_to_ptr.vmem [resolvable:$true] %s404
          %410 = dma.hbm_to_vmem [thread:$0]  %s6, 2048, %s405, [#allocation12], 128, 128, 8
        $region24: #{tpu_custom_call.1} parent=11 // pred_fallthru
          _
        // Predicated region
        $region25: #{tpu_custom_call.1} parent=11 // pred_check
          %p411 = pneg %p245
        $region26: #{tpu_custom_call.1} parent=11 // pred_check_branch
          %413 = sbr.rel (%p411) target = $region28
        $region27: #{tpu_custom_call.1} parent=11 // pred_region
          %s415 = ssub.s32 64, 64
          %416 = vsyncadd [#allocation15], %s415
          %s417 = sshll.u32 [#allocation14], 4
          %s418 = int_to_ptr.vmem [resolvable:$true] %s417
          %423 = dma.hbm_to_vmem [thread:$0]  %s7, 64, %s418, [#allocation15], 16, 16, 1
        $region28: #{tpu_custom_call.1} parent=11 // pred_fallthru
          _
        // Predicated region
        $region29: #{tpu_custom_call.1} parent=11 // pred_check
          %p424 = pneg %p266
        $region30: #{tpu_custom_call.1} parent=11 // pred_check_branch
          %426 = sbr.rel (%p424) target = $region32
        $region31: #{tpu_custom_call.1} parent=11 // pred_region
          %s428 = ssub.s32 2048, 2048
          %429 = vsyncadd [#allocation15], %s428
          %s430 = sshll.u32 [#allocation16], 4
          %s431 = int_to_ptr.vmem [resolvable:$true] %s430
          %436 = dma.hbm_to_vmem [thread:$0]  %s8, 2048, %s431, [#allocation15], 128, 128, 8
        $region32: #{tpu_custom_call.1} parent=11 // pred_fallthru
          _
        // Predicated region
        $region33: #{tpu_custom_call.1} parent=11 // pred_check
          %p437 = pneg %p287
        $region34: #{tpu_custom_call.1} parent=11 // pred_check_branch
          %439 = sbr.rel (%p437) target = $region36
        $region35: #{tpu_custom_call.1} parent=11 // pred_region
          %s441 = ssub.s32 64, 64
          %442 = vsyncadd [#allocation18], %s441
          %s443 = sshll.u32 [#allocation17], 4
          %s444 = int_to_ptr.vmem [resolvable:$true] %s443
          %449 = dma.hbm_to_vmem [thread:$0]  %s9, 64, %s444, [#allocation18], 16, 16, 1
        $region36: #{tpu_custom_call.1} parent=11 // pred_fallthru
          _
        // Predicated region
        $region37: #{tpu_custom_call.1} parent=11 // pred_check
          %p450 = pneg %p308
        $region38: #{tpu_custom_call.1} parent=11 // pred_check_branch
          %452 = sbr.rel (%p450) target = $region40
        $region39: #{tpu_custom_call.1} parent=11 // pred_region
          %s454 = ssub.s32 512, 512
          %455 = vsyncadd [#allocation18], %s454
          %s456 = sshll.u32 [#allocation19], 4
          %s457 = int_to_ptr.vmem [resolvable:$true] %s456
          %462 = dma.hbm_to_vmem [thread:$0]  %s10, 512, %s457, [#allocation18], 128, 128, 8
        $region40: #{tpu_custom_call.1} parent=11 // pred_fallthru
          _
        // Predicated region
        $region41: #{tpu_custom_call.1} parent=11 // pred_check
          %p463 = pneg %p329
        $region42: #{tpu_custom_call.1} parent=11 // pred_check_branch
          %465 = sbr.rel (%p463) target = $region44
        $region43: #{tpu_custom_call.1} parent=11 // pred_region
          %s467 = ssub.s32 16, 16
          %468 = vsyncadd [#allocation21], %s467
          %s470 = sshll.u32 [#allocation20], 4
          %s471 = int_to_ptr.vmem [resolvable:$true] %s470
          %473 = dma.hbm_to_vmem [thread:$0]  %s11, 16, %s471, [#allocation21]
        $region44: #{tpu_custom_call.1} parent=11 // pred_fallthru
          _
      $region12: #{tpu_custom_call.1} parent=5 // pred_fallthru
        _
      %p474 = scmp.lt.s32.totalorder %s34, 8
      // Predicated region
      $region45: #{tpu_custom_call.1} parent=5 // pred_check
        %p475 = pneg %p474
      $region46: #{tpu_custom_call.1} parent=5 // pred_check_branch
        %477 = sbr.rel (%p475) target = $region48
      $region47: #{tpu_custom_call.1} parent=5 // pred_region
        // Predicated region
        $region49: #{tpu_custom_call.1} parent=47 // pred_check
          %p478 = pneg %p75
        $region50: #{tpu_custom_call.1} parent=47 // pred_check_branch
          %480 = sbr.rel (%p478) target = $region52
        $region51: #{tpu_custom_call.1} parent=47 // pred_region
          %s481 = sand.u32 %s65, 1
          %s482 = scalar_lea.sflag [#allocation3], %s481
          %s483 = sand.u32 %s65, 1
          %s484 = smul.addr %s483, 16
          %s485 = scalar_lea.vmem [#allocation2], %s484
          %s486 = smul.u32 2, %s42
          %s488 = ssub.s32 256, 256
          %489 = vsyncadd %s482, %s488
          %s490 = smul.addr %s41, 2
          %s491 = sadd.s32 %s486, %s490
          %s492 = smul.addr %s491, 128
          %s493 = scalar_lea.hbm %s0, %s492
          %s494 = sshll.u32 %s485, 4
          %s495 = int_to_ptr.vmem [resolvable:$true] %s494
          %500 = dma.hbm_to_vmem [thread:$0]  %s493, 256, %s495, %s482, 128, 128, 8
        $region52: #{tpu_custom_call.1} parent=47 // pred_fallthru
          _
        // Predicated region
        $region53: #{tpu_custom_call.1} parent=47 // pred_check
          %p501 = pneg %p101
        $region54: #{tpu_custom_call.1} parent=47 // pred_check_branch
          %503 = sbr.rel (%p501) target = $region56
        $region55: #{tpu_custom_call.1} parent=47 // pred_region
          %s504 = sand.u32 %s34, 1
          %s505 = scalar_lea.sflag [#allocation6], %s504
          %s506 = sand.u32 %s91, 1
          %s507 = smul.addr %s506, 16
          %s508 = scalar_lea.vmem [#allocation5], %s507
          %s510 = ssub.s32 256, 256
          %511 = vsyncadd %s505, %s510
          %s512 = smul.addr %s41, 2
          %s513 = smul.addr %s512, 128
          %s514 = scalar_lea.hbm %s1, %s513
          %s515 = sshll.u32 %s508, 4
          %s516 = int_to_ptr.vmem [resolvable:$true] %s515
          %521 = dma.hbm_to_vmem [thread:$0]  %s514, 256, %s516, %s505, 128, 128, 8
        $region56: #{tpu_custom_call.1} parent=47 // pred_fallthru
          _
        // Predicated region
        $region57: #{tpu_custom_call.1} parent=47 // pred_check
          %p522 = pneg %p127
        $region58: #{tpu_custom_call.1} parent=47 // pred_check_branch
          %524 = sbr.rel (%p522) target = $region60
        $region59: #{tpu_custom_call.1} parent=47 // pred_region
          %s525 = sand.u32 %s34, 1
          %s526 = scalar_lea.sflag [#allocation6], %s525
          %s527 = sand.u32 %s117, 1
          %s528 = smul.addr %s527, 16
          %s529 = scalar_lea.vmem [#allocation7], %s528
          %s531 = ssub.s32 256, 256
          %532 = vsyncadd %s526, %s531
          %s533 = smul.addr %s41, 2
          %s534 = smul.addr %s533, 128
          %s535 = scalar_lea.hbm %s2, %s534
          %s536 = sshll.u32 %s529, 4
          %s537 = int_to_ptr.vmem [resolvable:$true] %s536
          %542 = dma.hbm_to_vmem [thread:$0]  %s535, 256, %s537, %s526, 128, 128, 8
        $region60: #{tpu_custom_call.1} parent=47 // pred_fallthru
          _
        // Predicated region
        $region61: #{tpu_custom_call.1} parent=47 // pred_check
          %p543 = pneg %p155
        $region62: #{tpu_custom_call.1} parent=47 // pred_check_branch
          %545 = sbr.rel (%p543) target = $region64
        $region63: #{tpu_custom_call.1} parent=47 // pred_region
          %s546 = sand.u32 %s34, 1
          %s547 = scalar_lea.sflag [#allocation9], %s546
          %s548 = sand.u32 %s145, 1
          %s549 = smul.addr %s548, 16
          %s550 = scalar_lea.vmem [#allocation8], %s549
          %s551 = smul.u32 2, %s42
          %s553 = ssub.s32 256, 256
          %554 = vsyncadd %s547, %s553
          %s555 = smul.addr %s41, 2
          %s556 = sadd.s32 %s551, %s555
          %s557 = smul.addr %s556, 128
          %s558 = scalar_lea.hbm %s3, %s557
          %s559 = sshll.u32 %s550, 4
          %s560 = int_to_ptr.vmem [resolvable:$true] %s559
          %565 = dma.hbm_to_vmem [thread:$0]  %s558, 256, %s560, %s547, 128, 128, 8
        $region64: #{tpu_custom_call.1} parent=47 // pred_fallthru
          _
      $region48: #{tpu_custom_call.1} parent=5 // pred_fallthru
        _
      %p566 = scmp.le.s32.totalorder 1, %s34
      %p567 = scmp.lt.s32.totalorder %s34, 9
      %p568 = pnand %p566, %p567
      %p569 = pneg %p568
      // Predicated region
      $region65: #{tpu_custom_call.1} parent=5 // pred_check
        _
      $region66: #{tpu_custom_call.1} parent=5 // pred_check_branch
        %571 = sbr.rel (%p568) target = $region68
      $region67: #{tpu_custom_call.1} parent=5 // pred_region
        %s572 = ssub.s32 %s34, 1
        %s573 = sand.u32 %s68, 1
        %s574 = scalar_lea.sflag [#allocation3], %s573
        %s575 = sand.u32 %s68, 1
        %s576 = smul.addr %s575, 16
        %s577 = scalar_lea.vmem [#allocation2], %s576
        // Predicated region
        $region69: #{tpu_custom_call.1} parent=67 // pred_check
          %p578 = pneg %p81
        $region70: #{tpu_custom_call.1} parent=67 // pred_check_branch
          %580 = sbr.rel (%p578) target = $region72
        $region71: #{tpu_custom_call.1} parent=67 // pred_region
          %581 = dma.done %s574, 256
        $region72: #{tpu_custom_call.1} parent=67 // pred_fallthru
          _
        %s582 = sand.u32 %s39, 1
        %s583 = scalar_lea.sflag [#allocation6], %s582
        %s584 = sand.u32 %s94, 1
        %s585 = smul.addr %s584, 16
        %s586 = scalar_lea.vmem [#allocation5], %s585
        // Predicated region
        $region73: #{tpu_custom_call.1} parent=67 // pred_check
          %p587 = pneg %p107
        $region74: #{tpu_custom_call.1} parent=67 // pred_check_branch
          %589 = sbr.rel (%p587) target = $region76
        $region75: #{tpu_custom_call.1} parent=67 // pred_region
          %590 = dma.done %s583, 256
        $region76: #{tpu_custom_call.1} parent=67 // pred_fallthru
          _
        %s591 = sand.u32 %s39, 1
        %s592 = scalar_lea.sflag [#allocation6], %s591
        %s593 = sand.u32 %s120, 1
        %s594 = smul.addr %s593, 16
        %s595 = scalar_lea.vmem [#allocation7], %s594
        // Predicated region
        $region77: #{tpu_custom_call.1} parent=67 // pred_check
          %p596 = pneg %p133
        $region78: #{tpu_custom_call.1} parent=67 // pred_check_branch
          %598 = sbr.rel (%p596) target = $region80
        $region79: #{tpu_custom_call.1} parent=67 // pred_region
          %599 = dma.done %s592, 256
        $region80: #{tpu_custom_call.1} parent=67 // pred_fallthru
          _
        %s600 = sand.u32 %s39, 1
        %s601 = scalar_lea.sflag [#allocation9], %s600
        %s602 = sand.u32 %s148, 1
        %s603 = smul.addr %s602, 16
        %s604 = scalar_lea.vmem [#allocation8], %s603
        // Predicated region
        $region81: #{tpu_custom_call.1} parent=67 // pred_check
          %p605 = pneg %p161
        $region82: #{tpu_custom_call.1} parent=67 // pred_check_branch
          %607 = sbr.rel (%p605) target = $region84
        $region83: #{tpu_custom_call.1} parent=67 // pred_region
          %608 = dma.done %s601, 256
        $region84: #{tpu_custom_call.1} parent=67 // pred_fallthru
          _
        // Predicated region
        $region85: #{tpu_custom_call.1} parent=67 // pred_check
          %p609 = pneg %p182
        $region86: #{tpu_custom_call.1} parent=67 // pred_check_branch
          %611 = sbr.rel (%p609) target = $region88
        $region87: #{tpu_custom_call.1} parent=67 // pred_region
          %612 = dma.done [#allocation9], 2048
        $region88: #{tpu_custom_call.1} parent=67 // pred_fallthru
          _
        // Predicated region
        $region89: #{tpu_custom_call.1} parent=67 // pred_check
          %p613 = pneg %p203
        $region90: #{tpu_custom_call.1} parent=67 // pred_check_branch
          %615 = sbr.rel (%p613) target = $region92
        $region91: #{tpu_custom_call.1} parent=67 // pred_region
          %616 = dma.done [#allocation12], 64
        $region92: #{tpu_custom_call.1} parent=67 // pred_fallthru
          _
        // Predicated region
        $region93: #{tpu_custom_call.1} parent=67 // pred_check
          %p617 = pneg %p224
        $region94: #{tpu_custom_call.1} parent=67 // pred_check_branch
          %619 = sbr.rel (%p617) target = $region96
        $region95: #{tpu_custom_call.1} parent=67 // pred_region
          %620 = dma.done [#allocation12], 2048
        $region96: #{tpu_custom_call.1} parent=67 // pred_fallthru
          _
        // Predicated region
        $region97: #{tpu_custom_call.1} parent=67 // pred_check
          %p621 = pneg %p245
        $region98: #{tpu_custom_call.1} parent=67 // pred_check_branch
          %623 = sbr.rel (%p621) target = $region100
        $region99: #{tpu_custom_call.1} parent=67 // pred_region
          %624 = dma.done [#allocation15], 64
        $region100: #{tpu_custom_call.1} parent=67 // pred_fallthru
          _
        // Predicated region
        $region101: #{tpu_custom_call.1} parent=67 // pred_check
          %p625 = pneg %p266
        $region102: #{tpu_custom_call.1} parent=67 // pred_check_branch
          %627 = sbr.rel (%p625) target = $region104
        $region103: #{tpu_custom_call.1} parent=67 // pred_region
          %628 = dma.done [#allocation15], 2048
        $region104: #{tpu_custom_call.1} parent=67 // pred_fallthru
          _
        // Predicated region
        $region105: #{tpu_custom_call.1} parent=67 // pred_check
          %p629 = pneg %p287
        $region106: #{tpu_custom_call.1} parent=67 // pred_check_branch
          %631 = sbr.rel (%p629) target = $region108
        $region107: #{tpu_custom_call.1} parent=67 // pred_region
          %632 = dma.done [#allocation18], 64
        $region108: #{tpu_custom_call.1} parent=67 // pred_fallthru
          _
        // Predicated region
        $region109: #{tpu_custom_call.1} parent=67 // pred_check
          %p633 = pneg %p308
        $region110: #{tpu_custom_call.1} parent=67 // pred_check_branch
          %635 = sbr.rel (%p633) target = $region112
        $region111: #{tpu_custom_call.1} parent=67 // pred_region
          %636 = dma.done [#allocation18], 512
        $region112: #{tpu_custom_call.1} parent=67 // pred_fallthru
          _
        // Predicated region
        $region113: #{tpu_custom_call.1} parent=67 // pred_check
          %p637 = pneg %p329
        $region114: #{tpu_custom_call.1} parent=67 // pred_check_branch
          %639 = sbr.rel (%p637) target = $region116
        $region115: #{tpu_custom_call.1} parent=67 // pred_region
          %640 = dma.done [#allocation21], 16
        $region116: #{tpu_custom_call.1} parent=67 // pred_fallthru
          _
        %s641 = sand.u32 %s68, 1
        %s642 = scalar_lea.sflag [#allocation3], %s641
        %s643 = sand.u32 %s68, 1
        %s644 = smul.addr %s643, 16
        %s645 = scalar_lea.vmem [#allocation2], %s644
        %p646 = pneg %p81
        %p647 = pneg %p78
        %s648 = sand.u32 %s39, 1
        %s649 = scalar_lea.sflag [#allocation6], %s648
        %s650 = sand.u32 %s94, 1
        %s651 = smul.addr %s650, 16
        %s652 = scalar_lea.vmem [#allocation5], %s651
        %p653 = pneg %p107
        %p654 = pneg %p104
        %s655 = sand.u32 %s39, 1
        %s656 = scalar_lea.sflag [#allocation6], %s655
        %s657 = sand.u32 %s120, 1
        %s658 = smul.addr %s657, 16
        %s659 = scalar_lea.vmem [#allocation7], %s658
        %p660 = pneg %p133
        %p661 = pneg %p130
        %s662 = sand.u32 %s39, 1
        %s663 = scalar_lea.sflag [#allocation9], %s662
        %s664 = sand.u32 %s148, 1
        %s665 = smul.addr %s664, 16
        %s666 = scalar_lea.vmem [#allocation8], %s665
        %p667 = pneg %p161
        %p668 = pneg %p158
        %p669 = pneg %p182
        %p670 = pneg %p179
        %p671 = pneg %p203
        %p672 = pneg %p200
        %p673 = pneg %p224
        %p674 = pneg %p221
        %p675 = pneg %p245
        %p676 = pneg %p242
        %p677 = pneg %p266
        %p678 = pneg %p263
        %p679 = pneg %p287
        %p680 = pneg %p284
        %p681 = pneg %p308
        %p682 = pneg %p305
        %p683 = pneg %p329
        %p684 = pneg %p326
        %p685 = pneg %p357
        %p686 = pneg %p354
        %s687 = sand.u32 %s344, 1
        %s688 = scalar_lea.sflag [#allocation4], %s687
        %s689 = sand.u32 %s344, 1
        %s690 = smul.addr %s689, 16
        %s691 = scalar_lea.vmem [#allocation22], %s690
        %s692 = smul.u32 2, %s45
        %s693 = smul.u32 2, %s45
        %s694 = smul.u32 2, %s45
        %p695 = scmp.eq.s32.totalorder %s46, 0
        // Predicated region
        $region117: #{tpu_custom_call.1} parent=67 // pred_check
          %p696 = pneg %p695
        $region118: #{tpu_custom_call.1} parent=67 // pred_check_branch
          %698 = sbr.rel (%p696) target = $region120
        $region119: #{tpu_custom_call.1} parent=67 // pred_region
          %v699 = vld [vmem:[#allocation20] sm:$0x1]
          %v701 = vlaneseq
          %v702 = vshrl.u32 %v701, 7
          %v703 = vsub.s32 0, %v702
          %v704 = vrot.slane %v699, %v703
          %vm706 = vcmask 261120
          %707 = vst.msk [vmem:[%s691] sm:$0xff] %vm706, %v704
          %708 = vst.msk [vmem:[%s691 + $0x8] sm:$0xff] %vm706, %v704
        $region120: #{tpu_custom_call.1} parent=67 // pred_fallthru
          _
        %v709 = vld [vmem:[%s577] sm:$0xff]
        %v710 = vld [vmem:[%s577 + $0x8] sm:$0xff]
        %v711 = vld [vmem:[%s586] sm:$0xff]
        %v712 = vld [vmem:[%s586 + $0x8] sm:$0xff]
        %v713 = vld [vmem:[%s595] sm:$0xff]
        %v714 = vld [vmem:[%s595 + $0x8] sm:$0xff]
        %s715 = smul.u32 %s46, 32
        %s716 = scalar_lea.vmem [#allocation10], %s715
        %v717 = vld [vmem:[%s716] sm:$0xff]
        %v718 = vld [vmem:[%s716 + $0x8] sm:$0xff]
        %v719 = vld [vmem:[%s716 + $0x10] sm:$0xff]
        %v720 = vld [vmem:[%s716 + $0x18] sm:$0xff]
        %s721 = scalar_lea.vmem [#allocation13], %s715
        %v722 = vld [vmem:[%s721] sm:$0xff]
        %v723 = vld [vmem:[%s721 + $0x8] sm:$0xff]
        %v724 = vld [vmem:[%s721 + $0x10] sm:$0xff]
        %v725 = vld [vmem:[%s721 + $0x18] sm:$0xff]
        %s726 = scalar_lea.vmem [#allocation16], %s715
        %v727 = vld [vmem:[%s726] sm:$0xff]
        %v728 = vld [vmem:[%s726 + $0x8] sm:$0xff]
        %v729 = vld [vmem:[%s726 + $0x10] sm:$0xff]
        %v730 = vld [vmem:[%s726 + $0x18] sm:$0xff]
        %s731 = smul.u32 %s46, 8
        %s732 = scalar_lea.vmem [#allocation19], %s731
        %v733 = vld [vmem:[%s732] sm:$0xff]
        %s734 = scalar_lea.vmem [#allocation11], %s46
        %v735 = vld [vmem:[%s734] sm:$0x1]
        %s736 = scalar_lea.vmem [#allocation14], %s46
        %v737 = vld [vmem:[%s736] sm:$0x1]
        %s738 = scalar_lea.vmem [#allocation17], %s46
        %v739 = vld [vmem:[%s738] sm:$0x1]
        %v741 = vlaneseq
        %v742 = vshrl.u32 %v741, 7
        %v743 = vsub.s32 0, %v742
        %v744 = vrot.slane %v735, %v743
        %vm746 = vcmask 261120
        %v748 = vsel %vm746, %v709, 0
        %v751 = vsel %vm746, %v710, 0
        %753 = vmatprep.subr.mxu0 0.0
        %754 = vmatpush1.msra.mxu0 %v717
        %755 = vmatprep.subr.mxu0 0.0
        %756 = vmatpush1.msra.mxu0 %v718
        %757 = vmatprep.subr.mxu0 0.0
        %758 = vmatpush1.msra.mxu0 %v719
        %759 = vmatprep.subr.mxu0 0.0
        %760 = vmatpush1.msra.mxu0 %v720
        %761 = vmatprep.subr.mxu0 0.0
        %762 = vmatpush1.msra.mxu0 0.0
        %763 = vmatprep.subr.mxu0 0.0
        %764 = vmatpush1.msra.mxu0 0.0
        %765 = vmatprep.subr.mxu0 0.0
        %766 = vmatpush1.msra.mxu0 0.0
        %767 = vmatprep.subr.mxu0 0.0
        %768 = vmatpush1.msra.mxu0 0.0
        %769 = vmatprep.subr.mxu0 0.0
        %770 = vmatpush1.msra.mxu0 0.0
        %771 = vmatprep.subr.mxu0 0.0
        %772 = vmatpush1.msra.mxu0 0.0
        %773 = vmatprep.subr.mxu0 0.0
        %774 = vmatpush1.msra.mxu0 0.0
        %775 = vmatprep.subr.mxu0 0.0
        %776 = vmatpush1.msra.mxu0 0.0
        %777 = vmatprep.subr.mxu0 0.0
        %778 = vmatpush1.msra.mxu0 0.0
        %779 = vmatprep.subr.mxu0 0.0
        %780 = vmatpush1.msra.mxu0 0.0
        %781 = vmatprep.subr.mxu0 0.0
        %782 = vmatpush1.msra.mxu0 0.0
        %783 = vmatprep.subr.mxu0 0.0
        %784 = vmatpush1.msra.mxu0 0.0
        %785 = vmatprep.subr.mxu0 0.0
        %786 = vmatpush1.msra.mxu0 0.0
        %787 = vmatprep.subr.mxu0 0.0
        %788 = vmatpush1.msra.mxu0 0.0
        %789 = vmatprep.subr.mxu0 0.0
        %790 = vmatpush1.msra.mxu0 0.0
        %791 = vmatprep.subr.mxu0 0.0
        %792 = vmatpush1.msra.mxu0 0.0
        %793 = vmatprep.subr.mxu0 0.0
        %794 = vmatpush1.msra.mxu0 0.0
        %795 = vmatprep.subr.mxu0 0.0
        %796 = vmatpush1.msra.mxu0 0.0
        %797 = vmatprep.subr.mxu0 0.0
        %798 = vmatpush1.msra.mxu0 0.0
        %799 = vmatprep.subr.mxu0 0.0
        %800 = vmatpush1.msra.mxu0 0.0
        %801 = vmatprep.subr.mxu0 0.0
        %802 = vmatpush1.msra.mxu0 0.0
        %803 = vmatprep.subr.mxu0 0.0
        %804 = vmatpush1.msra.mxu0 0.0
        %805 = vmatprep.subr.mxu0 0.0
        %806 = vmatpush1.msra.mxu0 0.0
        %807 = vmatprep.subr.mxu0 0.0
        %808 = vmatpush1.msra.mxu0 0.0
        %809 = vmatprep.subr.mxu0 0.0
        %810 = vmatpush1.msra.mxu0 0.0
        %811 = vmatprep.subr.mxu0 0.0
        %812 = vmatpush1.msra.mxu0 0.0
        %813 = vmatprep.subr.mxu0 0.0
        %814 = vmatpush1.msra.mxu0 0.0
        %815 = vmatprep.subr.mxu0 0.0
        %816 = vmatpush1.msra.mxu0 0.0
        %817 = vmatprep.mubr.f32.mxu0 0.0
        %818 = vmatmul.mubr.f32.gmra.mrb[0].mxu0 %v748
        %v819 = vpop.f32.mrb[0].mxu0
        %v820 = vadd.f32 %v744, %v819
        %v821 = vpop.f32.mrb[0].mxu0
        %822 = vmatprep.mubr.f32.mxu0 0.0
        %823 = vmatmul.mubr.f32.gmra.mrb[0].mxu0 %v751
        %v824 = vpop.f32.mrb[0].mxu0
        %v825 = vadd.f32 %v744, %v824
        %v826 = vpop.f32.mrb[0].mxu0
        %827 = vdwg.mxu0
        %v828 = vmul.f32 %v820, 0.35355338
        %v829 = vmul.f32 %v825, 0.35355338
        %v831 = vlaneseq
        %v832 = vshrl.u32 %v831, 7
        %v833 = vsub.s32 0, %v832
        %v834 = vrot.slane %v737, %v833
        %v837 = vsel %vm746, %v711, 0
        %v840 = vsel %vm746, %v712, 0
        %842 = vmatprep.subr.mxu0 0.0
        %843 = vmatpush1.msra.mxu0 %v722
        %844 = vmatprep.subr.mxu0 0.0
        %845 = vmatpush1.msra.mxu0 %v723
        %846 = vmatprep.subr.mxu0 0.0
        %847 = vmatpush1.msra.mxu0 %v724
        %848 = vmatprep.subr.mxu0 0.0
        %849 = vmatpush1.msra.mxu0 %v725
        %850 = vmatprep.subr.mxu0 0.0
        %851 = vmatpush1.msra.mxu0 0.0
        %852 = vmatprep.subr.mxu0 0.0
        %853 = vmatpush1.msra.mxu0 0.0
        %854 = vmatprep.subr.mxu0 0.0
        %855 = vmatpush1.msra.mxu0 0.0
        %856 = vmatprep.subr.mxu0 0.0
        %857 = vmatpush1.msra.mxu0 0.0
        %858 = vmatprep.subr.mxu0 0.0
        %859 = vmatpush1.msra.mxu0 0.0
        %860 = vmatprep.subr.mxu0 0.0
        %861 = vmatpush1.msra.mxu0 0.0
        %862 = vmatprep.subr.mxu0 0.0
        %863 = vmatpush1.msra.mxu0 0.0
        %864 = vmatprep.subr.mxu0 0.0
        %865 = vmatpush1.msra.mxu0 0.0
        %866 = vmatprep.subr.mxu0 0.0
        %867 = vmatpush1.msra.mxu0 0.0
        %868 = vmatprep.subr.mxu0 0.0
        %869 = vmatpush1.msra.mxu0 0.0
        %870 = vmatprep.subr.mxu0 0.0
        %871 = vmatpush1.msra.mxu0 0.0
        %872 = vmatprep.subr.mxu0 0.0
        %873 = vmatpush1.msra.mxu0 0.0
        %874 = vmatprep.subr.mxu0 0.0
        %875 = vmatpush1.msra.mxu0 0.0
        %876 = vmatprep.subr.mxu0 0.0
        %877 = vmatpush1.msra.mxu0 0.0
        %878 = vmatprep.subr.mxu0 0.0
        %879 = vmatpush1.msra.mxu0 0.0
        %880 = vmatprep.subr.mxu0 0.0
        %881 = vmatpush1.msra.mxu0 0.0
        %882 = vmatprep.subr.mxu0 0.0
        %883 = vmatpush1.msra.mxu0 0.0
        %884 = vmatprep.subr.mxu0 0.0
        %885 = vmatpush1.msra.mxu0 0.0
        %886 = vmatprep.subr.mxu0 0.0
        %887 = vmatpush1.msra.mxu0 0.0
        %888 = vmatprep.subr.mxu0 0.0
        %889 = vmatpush1.msra.mxu0 0.0
        %890 = vmatprep.subr.mxu0 0.0
        %891 = vmatpush1.msra.mxu0 0.0
        %892 = vmatprep.subr.mxu0 0.0
        %893 = vmatpush1.msra.mxu0 0.0
        %894 = vmatprep.subr.mxu0 0.0
        %895 = vmatpush1.msra.mxu0 0.0
        %896 = vmatprep.subr.mxu0 0.0
        %897 = vmatpush1.msra.mxu0 0.0
        %898 = vmatprep.subr.mxu0 0.0
        %899 = vmatpush1.msra.mxu0 0.0
        %900 = vmatprep.subr.mxu0 0.0
        %901 = vmatpush1.msra.mxu0 0.0
        %902 = vmatprep.subr.mxu0 0.0
        %903 = vmatpush1.msra.mxu0 0.0
        %904 = vmatprep.subr.mxu0 0.0
        %905 = vmatpush1.msra.mxu0 0.0
        %906 = vmatprep.mubr.f32.mxu0 0.0
        %907 = vmatmul.mubr.f32.gmra.mrb[0].mxu0 %v837
        %v908 = vpop.f32.mrb[0].mxu0
        %v909 = vadd.f32 %v834, %v908
        %v910 = vpop.f32.mrb[0].mxu0
        %911 = vmatprep.mubr.f32.mxu0 0.0
        %912 = vmatmul.mubr.f32.gmra.mrb[0].mxu0 %v840
        %v913 = vpop.f32.mrb[0].mxu0
        %v914 = vadd.f32 %v834, %v913
        %v915 = vpop.f32.mrb[0].mxu0
        %916 = vdwg.mxu0
        %v918 = vlaneseq
        %v919 = vshrl.u32 %v918, 7
        %v920 = vsub.s32 0, %v919
        %v921 = vrot.slane %v739, %v920
        %v924 = vsel %vm746, %v713, 0
        %v927 = vsel %vm746, %v714, 0
        %929 = vmatprep.subr.mxu0 0.0
        %930 = vmatpush1.msra.mxu0 %v727
        %931 = vmatprep.subr.mxu0 0.0
        %932 = vmatpush1.msra.mxu0 %v728
        %933 = vmatprep.subr.mxu0 0.0
        %934 = vmatpush1.msra.mxu0 %v729
        %935 = vmatprep.subr.mxu0 0.0
        %936 = vmatpush1.msra.mxu0 %v730
        %937 = vmatprep.subr.mxu0 0.0
        %938 = vmatpush1.msra.mxu0 0.0
        %939 = vmatprep.subr.mxu0 0.0
        %940 = vmatpush1.msra.mxu0 0.0
        %941 = vmatprep.subr.mxu0 0.0
        %942 = vmatpush1.msra.mxu0 0.0
        %943 = vmatprep.subr.mxu0 0.0
        %944 = vmatpush1.msra.mxu0 0.0
        %945 = vmatprep.subr.mxu0 0.0
        %946 = vmatpush1.msra.mxu0 0.0
        %947 = vmatprep.subr.mxu0 0.0
        %948 = vmatpush1.msra.mxu0 0.0
        %949 = vmatprep.subr.mxu0 0.0
        %950 = vmatpush1.msra.mxu0 0.0
        %951 = vmatprep.subr.mxu0 0.0
        %952 = vmatpush1.msra.mxu0 0.0
        %953 = vmatprep.subr.mxu0 0.0
        %954 = vmatpush1.msra.mxu0 0.0
        %955 = vmatprep.subr.mxu0 0.0
        %956 = vmatpush1.msra.mxu0 0.0
        %957 = vmatprep.subr.mxu0 0.0
        %958 = vmatpush1.msra.mxu0 0.0
        %959 = vmatprep.subr.mxu0 0.0
        %960 = vmatpush1.msra.mxu0 0.0
        %961 = vmatprep.subr.mxu0 0.0
        %962 = vmatpush1.msra.mxu0 0.0
        %963 = vmatprep.subr.mxu0 0.0
        %964 = vmatpush1.msra.mxu0 0.0
        %965 = vmatprep.subr.mxu0 0.0
        %966 = vmatpush1.msra.mxu0 0.0
        %967 = vmatprep.subr.mxu0 0.0
        %968 = vmatpush1.msra.mxu0 0.0
        %969 = vmatprep.subr.mxu0 0.0
        %970 = vmatpush1.msra.mxu0 0.0
        %971 = vmatprep.subr.mxu0 0.0
        %972 = vmatpush1.msra.mxu0 0.0
        %973 = vmatprep.subr.mxu0 0.0
        %974 = vmatpush1.msra.mxu0 0.0
        %975 = vmatprep.subr.mxu0 0.0
        %976 = vmatpush1.msra.mxu0 0.0
        %977 = vmatprep.subr.mxu0 0.0
        %978 = vmatpush1.msra.mxu0 0.0
        %979 = vmatprep.subr.mxu0 0.0
        %980 = vmatpush1.msra.mxu0 0.0
        %981 = vmatprep.subr.mxu0 0.0
        %982 = vmatpush1.msra.mxu0 0.0
        %983 = vmatprep.subr.mxu0 0.0
        %984 = vmatpush1.msra.mxu0 0.0
        %985 = vmatprep.subr.mxu0 0.0
        %986 = vmatpush1.msra.mxu0 0.0
        %987 = vmatprep.subr.mxu0 0.0
        %988 = vmatpush1.msra.mxu0 0.0
        %989 = vmatprep.subr.mxu0 0.0
        %990 = vmatpush1.msra.mxu0 0.0
        %991 = vmatprep.subr.mxu0 0.0
        %992 = vmatpush1.msra.mxu0 0.0
        %993 = vmatprep.mubr.f32.mxu0 0.0
        %994 = vmatmul.mubr.f32.gmra.mrb[0].mxu0 %v924
        %v995 = vpop.f32.mrb[0].mxu0
        %v996 = vadd.f32 %v921, %v995
        %v997 = vpop.f32.mrb[0].mxu0
        %998 = vmatprep.mubr.f32.mxu0 0.0
        %999 = vmatmul.mubr.f32.gmra.mrb[0].mxu0 %v927
        %v1000 = vpop.f32.mrb[0].mxu0
        %v1001 = vadd.f32 %v921, %v1000
        %v1002 = vpop.f32.mrb[0].mxu0
        %1003 = vdwg.mxu0
        %v1004 = vld [vmem:[%s604] sm:$0xff]
        %v1005 = vld [vmem:[%s604 + $0x8] sm:$0xff]
        %vm1006 = vcmask 64512
        %v1008 = vsel %vm1006, %v828, 0
        %v1011 = vsel %vm1006, %v829, 0
        %v1014 = vsel %vm1006, %v909, 0
        %v1017 = vsel %vm1006, %v914, 0
        %1019 = vmatprep.subr.mxu0 0.0
        %1020 = vmatpush1.xpose.msra.mxu0 %v1014
        %1021 = vmatprep.subr.mxu0 0.0
        %1022 = vmatpush1.xpose.msra.mxu0 %v1017
        %1023 = vmatprep.subr.mxu0 0.0
        %1024 = vmatpush1.xpose.msra.mxu0 0.0
        %1025 = vmatprep.subr.mxu0 0.0
        %1026 = vmatpush1.xpose.msra.mxu0 0.0
        %1027 = vmatprep.subr.mxu0 0.0
        %1028 = vmatpush1.xpose.msra.mxu0 0.0
        %1029 = vmatprep.subr.mxu0 0.0
        %1030 = vmatpush1.xpose.msra.mxu0 0.0
        %1031 = vmatprep.subr.mxu0 0.0
        %1032 = vmatpush1.xpose.msra.mxu0 0.0
        %1033 = vmatprep.subr.mxu0 0.0
        %1034 = vmatpush1.xpose.msra.mxu0 0.0
        %1035 = vmatprep.subr.mxu0 0.0
        %1036 = vmatpush1.xpose.msra.mxu0 0.0
        %1037 = vmatprep.subr.mxu0 0.0
        %1038 = vmatpush1.xpose.msra.mxu0 0.0
        %1039 = vmatprep.subr.mxu0 0.0
        %1040 = vmatpush1.xpose.msra.mxu0 0.0
        %1041 = vmatprep.subr.mxu0 0.0
        %1042 = vmatpush1.xpose.msra.mxu0 0.0
        %1043 = vmatprep.subr.mxu0 0.0
        %1044 = vmatpush1.xpose.msra.mxu0 0.0
        %1045 = vmatprep.subr.mxu0 0.0
        %1046 = vmatpush1.xpose.msra.mxu0 0.0
        %1047 = vmatprep.subr.mxu0 0.0
        %1048 = vmatpush1.xpose.msra.mxu0 0.0
        %1049 = vmatprep.subr.mxu0 0.0
        %1050 = vmatpush1.xpose.msra.mxu0 0.0
        %1051 = vmatprep.subr.mxu0 0.0
        %1052 = vmatpush1.xpose.msra.mxu0 0.0
        %1053 = vmatprep.subr.mxu0 0.0
        %1054 = vmatpush1.xpose.msra.mxu0 0.0
        %1055 = vmatprep.subr.mxu0 0.0
        %1056 = vmatpush1.xpose.msra.mxu0 0.0
        %1057 = vmatprep.subr.mxu0 0.0
        %1058 = vmatpush1.xpose.msra.mxu0 0.0
        %1059 = vmatprep.subr.mxu0 0.0
        %1060 = vmatpush1.xpose.msra.mxu0 0.0
        %1061 = vmatprep.subr.mxu0 0.0
        %1062 = vmatpush1.xpose.msra.mxu0 0.0
        %1063 = vmatprep.subr.mxu0 0.0
        %1064 = vmatpush1.xpose.msra.mxu0 0.0
        %1065 = vmatprep.subr.mxu0 0.0
        %1066 = vmatpush1.xpose.msra.mxu0 0.0
        %1067 = vmatprep.subr.mxu0 0.0
        %1068 = vmatpush1.xpose.msra.mxu0 0.0
        %1069 = vmatprep.subr.mxu0 0.0
        %1070 = vmatpush1.xpose.msra.mxu0 0.0
        %1071 = vmatprep.subr.mxu0 0.0
        %1072 = vmatpush1.xpose.msra.mxu0 0.0
        %1073 = vmatprep.subr.mxu0 0.0
        %1074 = vmatpush1.xpose.msra.mxu0 0.0
        %1075 = vmatprep.subr.mxu0 0.0
        %1076 = vmatpush1.xpose.msra.mxu0 0.0
        %1077 = vmatprep.subr.mxu0 0.0
        %1078 = vmatpush1.xpose.msra.mxu0 0.0
        %1079 = vmatprep.subr.mxu0 0.0
        %1080 = vmatpush1.xpose.msra.mxu0 0.0
        %1081 = vmatprep.subr.mxu0 0.0
        %1082 = vmatpush1.xpose.msra.mxu0 0.0
        %1083 = vmatprep.mubr.f32.mxu0 0.0
        %1084 = vmatmul.mubr.f32.gmra.mrb[0].mxu0 %v1008
        %v1085 = vpop.f32.mrb[0].mxu0
        %v1086 = vadd.f32 %v1004, %v1085
        %v1087 = vpop.f32.mrb[0].mxu0
        %1088 = vmatprep.mubr.f32.mxu0 0.0
        %1089 = vmatmul.mubr.f32.gmra.mrb[0].mxu0 %v1011
        %v1090 = vpop.f32.mrb[0].mxu0
        %v1091 = vadd.f32 %v1005, %v1090
        %v1092 = vpop.f32.mrb[0].mxu0
        %1093 = vdwg.mxu0
        %vm1094 = vcmask 130048
        %v1095 = vsel %vm1094, %v1086, -inf
        %1096 = vmax.xlane.f32.xlu0 %v1095
        %v1097 = vpop.xlane.xlu0 %1096
        %v1098 = vsel %vm1094, %v1091, -inf
        %1099 = vmax.xlane.f32.xlu0 %v1098
        %v1100 = vpop.xlane.xlu0 %1099
        %v1101 = vsub.f32 %v1086, %v1097
        %v1102 = vsub.f32 %v1091, %v1100
        %v1103 = vmul.f32 %v1101, 1.442695
        %v1104 = vpow.pop %v1103
        %v1105 = vmul.f32 %v1102, 1.442695
        %v1106 = vpow.pop %v1105
        %v1107 = vsel %vm1094, %v1104, 0.0
        %1108 = vadd.xlane.f32.xlu0 %v1107
        %v1109 = vpop.xlane.xlu0 %1108
        %v1110 = vsel %vm1094, %v1106, 0.0
        %1111 = vadd.xlane.f32.xlu0 %v1110
        %v1112 = vpop.xlane.xlu0 %1111
        %v1114 = vsel %vm1094, %v1104, 0
        %v1117 = vsel %vm1094, %v1106, 0
        %1119 = vmatprep.subr.mxu0 0.0
        %1120 = vmatpush1.msra.mxu0 %v996
        %1121 = vmatprep.subr.mxu0 0.0
        %1122 = vmatpush1.msra.mxu0 %v1001
        %1123 = vmatprep.subr.mxu0 0.0
        %1124 = vmatpush1.msra.mxu0 0.0
        %1125 = vmatprep.subr.mxu0 0.0
        %1126 = vmatpush1.msra.mxu0 0.0
        %1127 = vmatprep.subr.mxu0 0.0
        %1128 = vmatpush1.msra.mxu0 0.0
        %1129 = vmatprep.subr.mxu0 0.0
        %1130 = vmatpush1.msra.mxu0 0.0
        %1131 = vmatprep.subr.mxu0 0.0
        %1132 = vmatpush1.msra.mxu0 0.0
        %1133 = vmatprep.subr.mxu0 0.0
        %1134 = vmatpush1.msra.mxu0 0.0
        %1135 = vmatprep.subr.mxu0 0.0
        %1136 = vmatpush1.msra.mxu0 0.0
        %1137 = vmatprep.subr.mxu0 0.0
        %1138 = vmatpush1.msra.mxu0 0.0
        %1139 = vmatprep.subr.mxu0 0.0
        %1140 = vmatpush1.msra.mxu0 0.0
        %1141 = vmatprep.subr.mxu0 0.0
        %1142 = vmatpush1.msra.mxu0 0.0
        %1143 = vmatprep.subr.mxu0 0.0
        %1144 = vmatpush1.msra.mxu0 0.0
        %1145 = vmatprep.subr.mxu0 0.0
        %1146 = vmatpush1.msra.mxu0 0.0
        %1147 = vmatprep.subr.mxu0 0.0
        %1148 = vmatpush1.msra.mxu0 0.0
        %1149 = vmatprep.subr.mxu0 0.0
        %1150 = vmatpush1.msra.mxu0 0.0
        %1151 = vmatprep.subr.mxu0 0.0
        %1152 = vmatpush1.msra.mxu0 0.0
        %1153 = vmatprep.subr.mxu0 0.0
        %1154 = vmatpush1.msra.mxu0 0.0
        %1155 = vmatprep.subr.mxu0 0.0
        %1156 = vmatpush1.msra.mxu0 0.0
        %1157 = vmatprep.subr.mxu0 0.0
        %1158 = vmatpush1.msra.mxu0 0.0
        %1159 = vmatprep.subr.mxu0 0.0
        %1160 = vmatpush1.msra.mxu0 0.0
        %1161 = vmatprep.subr.mxu0 0.0
        %1162 = vmatpush1.msra.mxu0 0.0
        %1163 = vmatprep.subr.mxu0 0.0
        %1164 = vmatpush1.msra.mxu0 0.0
        %1165 = vmatprep.subr.mxu0 0.0
        %1166 = vmatpush1.msra.mxu0 0.0
        %1167 = vmatprep.subr.mxu0 0.0
        %1168 = vmatpush1.msra.mxu0 0.0
        %1169 = vmatprep.subr.mxu0 0.0
        %1170 = vmatpush1.msra.mxu0 0.0
        %1171 = vmatprep.subr.mxu0 0.0
        %1172 = vmatpush1.msra.mxu0 0.0
        %1173 = vmatprep.subr.mxu0 0.0
        %1174 = vmatpush1.msra.mxu0 0.0
        %1175 = vmatprep.subr.mxu0 0.0
        %1176 = vmatpush1.msra.mxu0 0.0
        %1177 = vmatprep.subr.mxu0 0.0
        %1178 = vmatpush1.msra.mxu0 0.0
        %1179 = vmatprep.subr.mxu0 0.0
        %1180 = vmatpush1.msra.mxu0 0.0
        %1181 = vmatprep.subr.mxu0 0.0
        %1182 = vmatpush1.msra.mxu0 0.0
        %1183 = vmatprep.mubr.f32.mxu0 0.0
        %1184 = vmatmul.mubr.f32.gmra.mrb[0].mxu0 %v1114
        %v1185 = vpop.f32.mrb[0].mxu0
        %v1186 = vadd.f32 0.0, %v1185
        %v1187 = vpop.f32.mrb[0].mxu0
        %1188 = vmatprep.mubr.f32.mxu0 0.0
        %1189 = vmatmul.mubr.f32.gmra.mrb[0].mxu0 %v1117
        %v1190 = vpop.f32.mrb[0].mxu0
        %v1191 = vadd.f32 0.0, %v1190
        %v1192 = vpop.f32.mrb[0].mxu0
        %1193 = vdwg.mxu0
        %v1194 = vrcp.pop %v1109
        %v1195 = vrcp.pop %v1112
        %v1196 = vmul.f32 %v1186, %v1194
        %v1197 = vmul.f32 %v1191, %v1195
        %v1199 = vsel %vm1006, %v1196, 0
        %v1202 = vsel %vm1006, %v1197, 0
        %1204 = vmatprep.subr.mxu0 0.0
        %1205 = vmatpush1.msra.mxu0 %v733
        %1206 = vmatprep.subr.mxu0 0.0
        %1207 = vmatpush1.msra.mxu0 0.0
        %1208 = vmatprep.subr.mxu0 0.0
        %1209 = vmatpush1.msra.mxu0 0.0
        %1210 = vmatprep.subr.mxu0 0.0
        %1211 = vmatpush1.msra.mxu0 0.0
        %1212 = vmatprep.subr.mxu0 0.0
        %1213 = vmatpush1.msra.mxu0 0.0
        %1214 = vmatprep.subr.mxu0 0.0
        %1215 = vmatpush1.msra.mxu0 0.0
        %1216 = vmatprep.subr.mxu0 0.0
        %1217 = vmatpush1.msra.mxu0 0.0
        %1218 = vmatprep.subr.mxu0 0.0
        %1219 = vmatpush1.msra.mxu0 0.0
        %1220 = vmatprep.subr.mxu0 0.0
        %1221 = vmatpush1.msra.mxu0 0.0
        %1222 = vmatprep.subr.mxu0 0.0
        %1223 = vmatpush1.msra.mxu0 0.0
        %1224 = vmatprep.subr.mxu0 0.0
        %1225 = vmatpush1.msra.mxu0 0.0
        %1226 = vmatprep.subr.mxu0 0.0
        %1227 = vmatpush1.msra.mxu0 0.0
        %1228 = vmatprep.subr.mxu0 0.0
        %1229 = vmatpush1.msra.mxu0 0.0
        %1230 = vmatprep.subr.mxu0 0.0
        %1231 = vmatpush1.msra.mxu0 0.0
        %1232 = vmatprep.subr.mxu0 0.0
        %1233 = vmatpush1.msra.mxu0 0.0
        %1234 = vmatprep.subr.mxu0 0.0
        %1235 = vmatpush1.msra.mxu0 0.0
        %1236 = vmatprep.subr.mxu0 0.0
        %1237 = vmatpush1.msra.mxu0 0.0
        %1238 = vmatprep.subr.mxu0 0.0
        %1239 = vmatpush1.msra.mxu0 0.0
        %1240 = vmatprep.subr.mxu0 0.0
        %1241 = vmatpush1.msra.mxu0 0.0
        %1242 = vmatprep.subr.mxu0 0.0
        %1243 = vmatpush1.msra.mxu0 0.0
        %1244 = vmatprep.subr.mxu0 0.0
        %1245 = vmatpush1.msra.mxu0 0.0
        %1246 = vmatprep.subr.mxu0 0.0
        %1247 = vmatpush1.msra.mxu0 0.0
        %1248 = vmatprep.subr.mxu0 0.0
        %1249 = vmatpush1.msra.mxu0 0.0
        %1250 = vmatprep.subr.mxu0 0.0
        %1251 = vmatpush1.msra.mxu0 0.0
        %1252 = vmatprep.subr.mxu0 0.0
        %1253 = vmatpush1.msra.mxu0 0.0
        %1254 = vmatprep.subr.mxu0 0.0
        %1255 = vmatpush1.msra.mxu0 0.0
        %1256 = vmatprep.subr.mxu0 0.0
        %1257 = vmatpush1.msra.mxu0 0.0
        %1258 = vmatprep.subr.mxu0 0.0
        %1259 = vmatpush1.msra.mxu0 0.0
        %1260 = vmatprep.subr.mxu0 0.0
        %1261 = vmatpush1.msra.mxu0 0.0
        %1262 = vmatprep.subr.mxu0 0.0
        %1263 = vmatpush1.msra.mxu0 0.0
        %1264 = vmatprep.subr.mxu0 0.0
        %1265 = vmatpush1.msra.mxu0 0.0
        %1266 = vmatprep.subr.mxu0 0.0
        %1267 = vmatpush1.msra.mxu0 0.0
        %1268 = vmatprep.mubr.f32.mxu0 0.0
        %1269 = vmatmul.mubr.f32.gmra.mrb[0].mxu0 %v1199
        %v1270 = vpop.f32.mrb[0].mxu0
        %v1271 = vadd.f32 0.0, %v1270
        %v1272 = vpop.f32.mrb[0].mxu0
        %1273 = vmatprep.mubr.f32.mxu0 0.0
        %1274 = vmatmul.mubr.f32.gmra.mrb[0].mxu0 %v1202
        %v1275 = vpop.f32.mrb[0].mxu0
        %v1276 = vadd.f32 0.0, %v1275
        %v1277 = vpop.f32.mrb[0].mxu0
        %1278 = vdwg.mxu0
        %v1279 = vld [vmem:[%s691] sm:$0xff]
        %v1280 = vld [vmem:[%s691 + $0x8] sm:$0xff]
        %v1281 = vadd.f32 %v1279, %v1271
        %v1282 = vadd.f32 %v1280, %v1276
        %1283 = vst.msk [vmem:[%s691] sm:$0xff] %vm746, %v1281
        %1284 = vst.msk [vmem:[%s691 + $0x8] sm:$0xff] %vm746, %v1282
        %s1285 = sand.u32 %s344, 1
        %s1286 = scalar_lea.sflag [#allocation4], %s1285
        %s1287 = sand.u32 %s344, 1
        %s1288 = smul.addr %s1287, 16
        %s1289 = scalar_lea.vmem [#allocation22], %s1288
        // Predicated region
        $region121: #{tpu_custom_call.1} parent=67 // pred_check
          %p1290 = pneg %p354
        $region122: #{tpu_custom_call.1} parent=67 // pred_check_branch
          %1292 = sbr.rel (%p1290) target = $region124
        $region123: #{tpu_custom_call.1} parent=67 // pred_region
          %s1293 = smul.u32 2, %s45
          %s1295 = ssub.s32 256, 256
          %1296 = vsyncadd %s1286, %s1295
          %s1297 = smul.addr %s44, 2
          %s1298 = sadd.s32 %s1293, %s1297
          %s1299 = smul.addr %s1298, 128
          %s1300 = scalar_lea.hbm %s12, %s1299
          %s1301 = sshll.u32 %s1289, 4
          %s1302 = int_to_ptr.vmem [resolvable:$true] %s1301
          %1307 = dma.vmem_to_hbm [thread:$0]  %s1302, 256, %s1300, %s1286, 128, 128, 8
        $region124: #{tpu_custom_call.1} parent=67 // pred_fallthru
          _
      $region68: #{tpu_custom_call.1} parent=5 // pred_fallthru
        _
      %p1308 = scmp.le.s32.totalorder 2, %s34
      // Predicated region
      $region125: #{tpu_custom_call.1} parent=5 // pred_check
        %p1309 = pneg %p1308
      $region126: #{tpu_custom_call.1} parent=5 // pred_check_branch
        %1311 = sbr.rel (%p1309) target = $region128
      $region127: #{tpu_custom_call.1} parent=5 // pred_region
        %s1312 = ssub.s32 %s34, 2
        // Predicated region
        $region129: #{tpu_custom_call.1} parent=127 // pred_check
          %p1313 = pneg %p360
        $region130: #{tpu_custom_call.1} parent=127 // pred_check_branch
          %1315 = sbr.rel (%p1313) target = $region132
        $region131: #{tpu_custom_call.1} parent=127 // pred_region
          %s1316 = sand.u32 %s345, 1
          %s1317 = scalar_lea.sflag [#allocation4], %s1316
          %s1318 = sand.u32 %s345, 1
          %s1319 = smul.addr %s1318, 16
          %s1320 = scalar_lea.vmem [#allocation22], %s1319
          %1321 = dma.done %s1317, 256
        $region132: #{tpu_custom_call.1} parent=127 // pred_fallthru
          _
      $region128: #{tpu_custom_call.1} parent=5 // pred_fallthru
        _
    $region6: #{tpu_custom_call.1} parent=1 // loop_footer
      %s38 = sadd.s32 1, %s34
    $region7: #{tpu_custom_call.1} parent=1 // loop_footer_branch
      %33 = sbr.rel target = $region3
    $region8: #{tpu_custom_call.1} parent=1 // loop_exit
      _
    %1322 = vsyncpa [#allocation3], 1
    %s1323 = scalar_lea.sflag [#allocation3], 1
    %1324 = vsyncpa %s1323, 1
    %1325 = vsyncpa [#allocation6], 1
    %s1326 = scalar_lea.sflag [#allocation6], 1
    %1327 = vsyncpa %s1326, 1
    %1328 = vsyncpa [#allocation9], 1
    %s1329 = scalar_lea.sflag [#allocation9], 1
    %1330 = vsyncpa %s1329, 1
    %1331 = vsyncpa [#allocation12], 1
    %1332 = vsyncpa [#allocation15], 1
    %1333 = vsyncpa [#allocation18], 1
    %1334 = vsyncpa [#allocation21], 1
    %1335 = vsyncpa [#allocation4], 1
    %s1336 = scalar_lea.sflag [#allocation4], 1
    %1337 = vsyncpa %s1336, 1

</llo_original>
